<compile_context>
chip_gen: v5e
topology: v5e:2x2
jax: 0.10.0
libtpu: 0.0.40
codegen_flags: <defaults>
</compile_context>

<pallas_src>
import functools

import jax
import jax.numpy as jnp
from jax import lax
from jax.experimental import pallas as pl
from jax.experimental.pallas import tpu as pltpu


# ---------------------------------------------------------------------------
# Pallas kernel (one grid step = one transformer layer on one chunk of sequences)
# ---------------------------------------------------------------------------

def _layer_norm(x, gamma, beta, eps=1e-5):
    mean = jnp.mean(x, axis=-1, keepdims=True)
    var = jnp.mean((x - mean) ** 2, axis=-1, keepdims=True)
    return (x - mean) * lax.rsqrt(var + eps) * gamma + beta


def encoder_kernel(x_ref, wqkv_ref, bqkv_ref, wo_ref, bo_ref,
                   ln1g_ref, ln1b_ref, w1_ref, b1_ref, w2_ref, b2_ref,
                   ln2g_ref, ln2b_ref, out_ref, x_scr,
                   *, num_heads, n_seq, a_len, hidden):
    l = pl.program_id(1)
    num_layers = pl.num_programs(1)
    hd = hidden // num_heads
    scale = 1.0 / float(hd) ** 0.5
    rows = n_seq * a_len

    # Load this chunk's input into the resident VMEM activation on the first layer.
    @pl.when(l == 0)
    def _():
        x_scr[...] = x_ref[0].reshape(rows, hidden)

    x = x_scr[...]                                             # [n_seq*A, H]

    # --- multi-head self attention: fused QKV projection, all sequences batched ---
    qkv = jnp.dot(x, wqkv_ref[0], preferred_element_type=jnp.float32) + bqkv_ref[0]
    q = qkv[:, 0:hidden].reshape(n_seq, a_len, hidden)
    k = qkv[:, hidden:2 * hidden].reshape(n_seq, a_len, hidden)
    v = qkv[:, 2 * hidden:3 * hidden].reshape(n_seq, a_len, hidden)

    head_outs = []
    for h in range(num_heads):                                 # static unroll over heads
        sl = slice(h * hd, (h + 1) * hd)
        qh, kh, vh = q[..., sl], k[..., sl], v[..., sl]
        s = jnp.einsum('nqd,nkd->nqk', qh, kh,
                       preferred_element_type=jnp.float32) * scale       # [n, A, A]
        s = s - jnp.max(s, axis=-1, keepdims=True)
        p = jnp.exp(s)
        # exact reciprocal: keeps max-err comfortably under the 1e-4 check
        p = p * pl.reciprocal(jnp.sum(p, axis=-1, keepdims=True), approx=False)
        head_outs.append(jnp.einsum('nqk,nkd->nqd', p, vh,
                                    preferred_element_type=jnp.float32))
    attn = jnp.concatenate(head_outs, axis=-1).reshape(rows, hidden)
    attn = jnp.dot(attn, wo_ref[0], preferred_element_type=jnp.float32) + bo_ref[0]

    # residual + LayerNorm 1 (post-LN)
    x = _layer_norm(x + attn, ln1g_ref[0], ln1b_ref[0])

    # --- feed-forward (ReLU), all sequences batched ---
    ff = jnp.maximum(
        jnp.dot(x, w1_ref[0], preferred_element_type=jnp.float32) + b1_ref[0], 0.0)
    ff = jnp.dot(ff, w2_ref[0], preferred_element_type=jnp.float32) + b2_ref[0]

    # residual + LayerNorm 2
    x = _layer_norm(x + ff, ln2g_ref[0], ln2b_ref[0])
    x_scr[...] = x

    # --- fused pooling on the last layer: h = ReLU(x[:, 0, :]) ---
    @pl.when(l == num_layers - 1)
    def _():
        pooled = jnp.concatenate(
            [x[n * a_len:n * a_len + 1, :] for n in range(n_seq)], axis=0)  # [n_seq, H]
        out_ref[0] = jnp.maximum(pooled, 0.0)


# ---------------------------------------------------------------------------
# Wrapper: one pallas_call for the whole encoder
# ---------------------------------------------------------------------------

_STACKED_ORDER = ['wo', 'bo', 'ln1g', 'ln1b', 'w1', 'b1', 'w2', 'b2', 'ln2g', 'ln2b']


def piglet_object_encoder(object_embeddings, layer_params, num_heads, num_chunks=None):
    """object_embeddings: [B, O, A, H] -> [B, O, H]."""
    B, O, A, H = object_embeddings.shape
    N = B * O
    L = len(layer_params)
    if num_chunks is None:
        num_chunks = 2 if N % 2 == 0 else 1   # 2 chunks -> split across v7x's 2 TCs
    NC = num_chunks
    Nc = N // NC
    assert Nc * NC == N

    x = object_embeddings.reshape(NC, Nc, A, H)      # 'b o a h -> (chunks) (b o / chunks) a h'

    def stack(name):
        return jnp.stack([p[name] for p in layer_params], axis=0)

    # fused QKV weights/biases: [L, H, 3H] / [L, 1, 3H]
    wqkv = jnp.concatenate([stack('wq'), stack('wk'), stack('wv')], axis=-1)
    bqkv = jnp.concatenate([stack('bq'), stack('bk'), stack('bv')], axis=-1)
    weight_args = [wqkv, bqkv] + [stack(n) for n in _STACKED_ORDER]

    def layer_spec(arr):   # all stacked weights are 3-D [L, r, c]
        return pl.BlockSpec((1,) + arr.shape[1:], lambda c, l: (l, 0, 0))

    in_specs = [pl.BlockSpec((1, Nc, A, H), lambda c, l: (c, 0, 0, 0))]
    in_specs += [layer_spec(a) for a in weight_args]

    kernel = functools.partial(encoder_kernel, num_heads=num_heads,
                               n_seq=Nc, a_len=A, hidden=H)
    out = pl.pallas_call(
        kernel,
        out_shape=jax.ShapeDtypeStruct((NC, Nc, H), object_embeddings.dtype),
        grid=(NC, L),
        in_specs=in_specs,
        out_specs=pl.BlockSpec((1, Nc, H), lambda c, l: (c, 0, 0)),
        scratch_shapes=[pltpu.VMEM((Nc * A, H), jnp.float32)],
        compiler_params=pltpu.CompilerParams(
            dimension_semantics=("parallel", "arbitrary")),
    )(x, *weight_args)
    return out.reshape(B, O, H)                      # '(b o) h -> b o h'


# ---------------------------------------------------------------------------
# Pure-JAX reference (for correctness check)
# ---------------------------------------------------------------------------

def _ref_layer(x, p, num_heads):
    def ln(y, g, b, eps=1e-5):
        m = y.mean(-1, keepdims=True)
        v = ((y - m) ** 2).mean(-1, keepdims=True)
        return (y - m) / jnp.sqrt(v + eps) * g + b

    N, A, H = x.shape
    hd = H // num_heads
    q = x @ p['wq'] + p['bq']
    k = x @ p['wk'] + p['bk']
    v = x @ p['wv'] + p['bv']
    qh = q.reshape(N, A, num_heads, hd).transpose(0, 2, 1, 3)
    kh = k.reshape(N, A, num_heads, hd).transpose(0, 2, 1, 3)
    vh = v.reshape(N, A, num_heads, hd).transpose(0, 2, 1, 3)
    s = jnp.einsum('nhqd,nhkd->nhqk', qh, kh) / jnp.sqrt(float(hd))
    a = jax.nn.softmax(s, axis=-1)
    o = jnp.einsum('nhqk,nhkd->nhqd', a, vh).transpose(0, 2, 1, 3).reshape(N, A, H)
    o = o @ p['wo'] + p['bo']
    x = ln(x + o, p['ln1g'], p['ln1b'])
    f = jax.nn.relu(x @ p['w1'] + p['b1']) @ p['w2'] + p['b2']
    return ln(x + f, p['ln2g'], p['ln2b'])


def _ref_encoder(obj_emb, layer_params, num_heads):
    B, O, A, H = obj_emb.shape
    x = obj_emb.reshape(B * O, A, H)
    for p in layer_params:
        x = _ref_layer(x, p, num_heads)
    return jax.nn.relu(x[:, 0]).reshape(B, O, H)


# ---------------------------------------------------------------------------
# Deterministic parameter init
# ---------------------------------------------------------------------------

def init_layer_params(key, hidden, ffn, num_layers):
    layers = []
    for l in range(num_layers):
        ks = jax.random.split(jax.random.fold_in(key, l), 10)
        s = 0.05
        layers.append(dict(
            wq=jax.random.normal(ks[0], (hidden, hidden), jnp.float32) * s,
            wk=jax.random.normal(ks[1], (hidden, hidden), jnp.float32) * s,
            wv=jax.random.normal(ks[2], (hidden, hidden), jnp.float32) * s,
            bq=jax.random.normal(ks[3], (1, hidden), jnp.float32) * 0.01,
            bk=jax.random.normal(ks[4], (1, hidden), jnp.float32) * 0.01,
            bv=jax.random.normal(ks[5], (1, hidden), jnp.float32) * 0.01,
            wo=jax.random.normal(ks[6], (hidden, hidden), jnp.float32) * s,
            bo=jnp.zeros((1, hidden), jnp.float32),
            ln1g=jnp.ones((1, hidden), jnp.float32),
            ln1b=jnp.zeros((1, hidden), jnp.float32),
            w1=jax.random.normal(ks[7], (hidden, ffn), jnp.float32) * s,
            b1=jax.random.normal(ks[8], (1, ffn), jnp.float32) * 0.01,
            w2=jax.random.normal(ks[9], (ffn, hidden), jnp.float32) * s,
            b2=jnp.zeros((1, hidden), jnp.float32),
            ln2g=jnp.ones((1, hidden), jnp.float32),
            ln2b=jnp.zeros((1, hidden), jnp.float32),
        ))
    return layers


# ---------------------------------------------------------------------------
# Main
# ---------------------------------------------------------------------------

if __name__ == "__main__":
    batch_size, num_objects = 2, 3
    num_attributes = 8          # sequence length A
    hidden_size = 32            # H
    num_heads = 4
    num_layers = 3
    ffn_size = 64

    key = jax.random.PRNGKey(0)
    k_in, k_par = jax.random.split(key)

    object_embeddings = jax.random.normal(
        k_in, (batch_size, num_objects, num_attributes, hidden_size), jnp.float32)
    layer_params = init_layer_params(k_par, hidden_size, ffn_size, num_layers)

    out = piglet_object_encoder(object_embeddings, layer_params, num_heads)
    out = jax.block_until_ready(out)

    ref = _ref_encoder(object_embeddings, layer_params, num_heads)
    assert out.shape == (batch_size, num_objects, hidden_size)
    max_err = float(jnp.max(jnp.abs(out - ref)))
    assert max_err < 1e-4, f"mismatch vs reference: {max_err}"

    print("KERNEL_OK")
</pallas_src>

<mosaic_0001>
module attributes {stable_mosaic.version = 11 : i64} {
  func.func @encoder_kernel(%arg0: i32, %arg1: i32, %arg2: memref<1x3x8x32xf32, #tpu.memory_space<vmem>>, %arg3: memref<1x32x96xf32, #tpu.memory_space<vmem>>, %arg4: memref<1x1x96xf32, #tpu.memory_space<vmem>>, %arg5: memref<1x32x32xf32, #tpu.memory_space<vmem>>, %arg6: memref<1x1x32xf32, #tpu.memory_space<vmem>>, %arg7: memref<1x1x32xf32, #tpu.memory_space<vmem>>, %arg8: memref<1x1x32xf32, #tpu.memory_space<vmem>>, %arg9: memref<1x32x64xf32, #tpu.memory_space<vmem>>, %arg10: memref<1x1x64xf32, #tpu.memory_space<vmem>>, %arg11: memref<1x64x32xf32, #tpu.memory_space<vmem>>, %arg12: memref<1x1x32xf32, #tpu.memory_space<vmem>>, %arg13: memref<1x1x32xf32, #tpu.memory_space<vmem>>, %arg14: memref<1x1x32xf32, #tpu.memory_space<vmem>>, %arg15: memref<1x3x32xf32, #tpu.memory_space<vmem>>, %arg16: memref<24x32xf32, #tpu.memory_space<vmem>>) attributes {dimension_semantics = [#tpu.dimension_semantics<parallel>, #tpu.dimension_semantics<arbitrary>], iteration_bounds = array<i64: 2, 3>, scalar_prefetch = 0 : i64, scratch_operands = 1 : i64, tpu.core_type = #tpu.core_type<tc>, window_params = [{transform_indices = @transform_0, window_bounds = array<i64: 1, 3, 8, 32>}, {transform_indices = @transform_1, window_bounds = array<i64: 1, 32, 96>}, {transform_indices = @transform_2, window_bounds = array<i64: 1, 1, 96>}, {transform_indices = @transform_3, window_bounds = array<i64: 1, 32, 32>}, {transform_indices = @transform_4, window_bounds = array<i64: 1, 1, 32>}, {transform_indices = @transform_5, window_bounds = array<i64: 1, 1, 32>}, {transform_indices = @transform_6, window_bounds = array<i64: 1, 1, 32>}, {transform_indices = @transform_7, window_bounds = array<i64: 1, 32, 64>}, {transform_indices = @transform_8, window_bounds = array<i64: 1, 1, 64>}, {transform_indices = @transform_9, window_bounds = array<i64: 1, 64, 32>}, {transform_indices = @transform_10, window_bounds = array<i64: 1, 1, 32>}, {transform_indices = @transform_11, window_bounds = array<i64: 1, 1, 32>}, {transform_indices = @transform_12, window_bounds = array<i64: 1, 1, 32>}, {transform_indices = @transform_13, window_bounds = array<i64: 1, 3, 32>}]} {
    %c0_i32 = arith.constant 0 : i32
    %0 = arith.cmpi eq, %arg1, %c0_i32 : i32
    %1 = arith.extui %0 : i1 to i32
    %c0_i32_0 = arith.constant 0 : i32
    %2 = arith.cmpi ne, %1, %c0_i32_0 : i32
    scf.if %2 {
      %c0_75 = arith.constant 0 : index
      %c0_76 = arith.constant 0 : index
      %c0_77 = arith.constant 0 : index
      %c0_78 = arith.constant 0 : index
      %168 = vector.load %arg2[%c0_75, %c0_76, %c0_77, %c0_78] : memref<1x3x8x32xf32, #tpu.memory_space<vmem>>, vector<1x3x8x32xf32>
      %169 = vector.shape_cast %168 : vector<1x3x8x32xf32> to vector<3x8x32xf32>
      %170 = vector.shape_cast %169 : vector<3x8x32xf32> to vector<24x32xf32>
      %c0_79 = arith.constant 0 : index
      %c0_80 = arith.constant 0 : index
      %171 = vector.load %arg16[%c0_79, %c0_80] : memref<24x32xf32, #tpu.memory_space<vmem>>, vector<24x32xf32>
      tpu.vector_store %arg16[%c0_79, %c0_80], %170 {strides = array<i32>} : memref<24x32xf32, #tpu.memory_space<vmem>>, vector<24x32xf32>,
    } else {
    }
    %c0 = arith.constant 0 : index
    %c0_1 = arith.constant 0 : index
    %3 = vector.load %arg16[%c0, %c0_1] : memref<24x32xf32, #tpu.memory_space<vmem>>, vector<24x32xf32>
    %c0_2 = arith.constant 0 : index
    %c0_3 = arith.constant 0 : index
    %c0_4 = arith.constant 0 : index
    %4 = vector.load %arg3[%c0_2, %c0_3, %c0_4] : memref<1x32x96xf32, #tpu.memory_space<vmem>>, vector<1x32x96xf32>
    %5 = vector.shape_cast %4 : vector<1x32x96xf32> to vector<32x96xf32>
    %cst = arith.constant dense<0.000000e+00> : vector<24x96xf32>
    %6 = tpu.matmul %3, %5, %cst {dimension_numbers = #tpu.dot_dimension_numbers<[1], [0], [0], [1], [0, 0, 1, 1], [], []>} : vector<24x32xf32>, vector<32x96xf32>, vector<24x96xf32> -> vector<24x96xf32>
    %c0_5 = arith.constant 0 : index
    %c0_6 = arith.constant 0 : index
    %c0_7 = arith.constant 0 : index
    %7 = vector.load %arg4[%c0_5, %c0_6, %c0_7] : memref<1x1x96xf32, #tpu.memory_space<vmem>>, vector<1x1x96xf32>
    %8 = vector.shape_cast %7 : vector<1x1x96xf32> to vector<1x96xf32>
    %9 = vector.broadcast %8 : vector<1x96xf32> to vector<24x96xf32>
    %10 = arith.addf %6, %9 : vector<24x96xf32>
    %11 = vector.extract_strided_slice %10 {offsets = [0, 0], sizes = [24, 32], strides = [1, 1]} : vector<24x96xf32> to vector<24x32xf32>
    %12 = vector.shape_cast %11 : vector<24x32xf32> to vector<3x8x32xf32>
    %13 = vector.extract_strided_slice %10 {offsets = [0, 32], sizes = [24, 32], strides = [1, 1]} : vector<24x96xf32> to vector<24x32xf32>
    %14 = vector.shape_cast %13 : vector<24x32xf32> to vector<3x8x32xf32>
    %15 = vector.extract_strided_slice %10 {offsets = [0, 64], sizes = [24, 32], strides = [1, 1]} : vector<24x96xf32> to vector<24x32xf32>
    %16 = vector.shape_cast %15 : vector<24x32xf32> to vector<3x8x32xf32>
    %17 = vector.extract_strided_slice %12 {offsets = [0, 0, 0], sizes = [3, 8, 8], strides = [1, 1, 1]} : vector<3x8x32xf32> to vector<3x8x8xf32>
    %18 = vector.extract_strided_slice %14 {offsets = [0, 0, 0], sizes = [3, 8, 8], strides = [1, 1, 1]} : vector<3x8x32xf32> to vector<3x8x8xf32>
    %19 = vector.extract_strided_slice %16 {offsets = [0, 0, 0], sizes = [3, 8, 8], strides = [1, 1, 1]} : vector<3x8x32xf32> to vector<3x8x8xf32>
    "tpu.trace_start"() <{level = 10 : i32, message = "nqd,nkd->nqk"}> : () -> ()
    %cst_8 = arith.constant dense<0.000000e+00> : vector<3x8x8xf32>
    %20 = tpu.matmul %17, %18, %cst_8 {dimension_numbers = #tpu.dot_dimension_numbers<[2], [2], [1], [1], [0, 0, 0, 1, 1, 1], [0], [0]>} : vector<3x8x8xf32>, vector<3x8x8xf32>, vector<3x8x8xf32> -> vector<3x8x8xf32>
    "tpu.trace_stop"() : () -> ()
    %cst_9 = arith.constant 0.353553385 : f32
    %21 = vector.broadcast %cst_9 : f32 to vector<3x8x8xf32>
    %22 = arith.mulf %20, %21 : vector<3x8x8xf32>
    %cst_10 = arith.constant dense<0xFF800000> : vector<3x8xf32>
    %23 = vector.multi_reduction <maximumf>, %22, %cst_10 [2] : vector<3x8x8xf32> to vector<3x8xf32>
    %24 = vector.shape_cast %23 : vector<3x8xf32> to vector<3x8x1xf32>
    %25 = vector.broadcast %24 : vector<3x8x1xf32> to vector<3x8x8xf32>
    %26 = arith.subf %22, %25 : vector<3x8x8xf32>
    %27 = math.exp %26 : vector<3x8x8xf32>
    %cst_11 = arith.constant dense<0.000000e+00> : vector<3x8xf32>
    %28 = vector.multi_reduction <add>, %27, %cst_11 [2] : vector<3x8x8xf32> to vector<3x8xf32>
    %29 = vector.shape_cast %28 : vector<3x8xf32> to vector<3x8x1xf32>
    %30 = tpu.reciprocal %29 : vector<3x8x1xf32> -> vector<3x8x1xf32>
    %31 = vector.broadcast %30 : vector<3x8x1xf32> to vector<3x8x8xf32>
    %32 = arith.mulf %27, %31 : vector<3x8x8xf32>
    "tpu.trace_start"() <{level = 10 : i32, message = "nqk,nkd->nqd"}> : () -> ()
    %cst_12 = arith.constant dense<0.000000e+00> : vector<3x8x8xf32>
    %33 = tpu.matmul %32, %19, %cst_12 {dimension_numbers = #tpu.dot_dimension_numbers<[2], [1], [1], [2], [0, 0, 0, 1, 1, 2], [0], [0]>} : vector<3x8x8xf32>, vector<3x8x8xf32>, vector<3x8x8xf32> -> vector<3x8x8xf32>
    "tpu.trace_stop"() : () -> ()
    %34 = vector.extract_strided_slice %12 {offsets = [0, 0, 8], sizes = [3, 8, 8], strides = [1, 1, 1]} : vector<3x8x32xf32> to vector<3x8x8xf32>
    %35 = vector.extract_strided_slice %14 {offsets = [0, 0, 8], sizes = [3, 8, 8], strides = [1, 1, 1]} : vector<3x8x32xf32> to vector<3x8x8xf32>
    %36 = vector.extract_strided_slice %16 {offsets = [0, 0, 8], sizes = [3, 8, 8], strides = [1, 1, 1]} : vector<3x8x32xf32> to vector<3x8x8xf32>
    "tpu.trace_start"() <{level = 10 : i32, message = "nqd,nkd->nqk"}> : () -> ()
    %cst_13 = arith.constant dense<0.000000e+00> : vector<3x8x8xf32>
    %37 = tpu.matmul %34, %35, %cst_13 {dimension_numbers = #tpu.dot_dimension_numbers<[2], [2], [1], [1], [0, 0, 0, 1, 1, 1], [0], [0]>} : vector<3x8x8xf32>, vector<3x8x8xf32>, vector<3x8x8xf32> -> vector<3x8x8xf32>
    "tpu.trace_stop"() : () -> ()
    %cst_14 = arith.constant 0.353553385 : f32
    %38 = vector.broadcast %cst_14 : f32 to vector<3x8x8xf32>
    %39 = arith.mulf %37, %38 : vector<3x8x8xf32>
    %cst_15 = arith.constant dense<0xFF800000> : vector<3x8xf32>
    %40 = vector.multi_reduction <maximumf>, %39, %cst_15 [2] : vector<3x8x8xf32> to vector<3x8xf32>
    %41 = vector.shape_cast %40 : vector<3x8xf32> to vector<3x8x1xf32>
    %42 = vector.broadcast %41 : vector<3x8x1xf32> to vector<3x8x8xf32>
    %43 = arith.subf %39, %42 : vector<3x8x8xf32>
    %44 = math.exp %43 : vector<3x8x8xf32>
    %cst_16 = arith.constant dense<0.000000e+00> : vector<3x8xf32>
    %45 = vector.multi_reduction <add>, %44, %cst_16 [2] : vector<3x8x8xf32> to vector<3x8xf32>
    %46 = vector.shape_cast %45 : vector<3x8xf32> to vector<3x8x1xf32>
    %47 = tpu.reciprocal %46 : vector<3x8x1xf32> -> vector<3x8x1xf32>
    %48 = vector.broadcast %47 : vector<3x8x1xf32> to vector<3x8x8xf32>
    %49 = arith.mulf %44, %48 : vector<3x8x8xf32>
    "tpu.trace_start"() <{level = 10 : i32, message = "nqk,nkd->nqd"}> : () -> ()
    %cst_17 = arith.constant dense<0.000000e+00> : vector<3x8x8xf32>
    %50 = tpu.matmul %49, %36, %cst_17 {dimension_numbers = #tpu.dot_dimension_numbers<[2], [1], [1], [2], [0, 0, 0, 1, 1, 2], [0], [0]>} : vector<3x8x8xf32>, vector<3x8x8xf32>, vector<3x8x8xf32> -> vector<3x8x8xf32>
    "tpu.trace_stop"() : () -> ()
    %51 = vector.extract_strided_slice %12 {offsets = [0, 0, 16], sizes = [3, 8, 8], strides = [1, 1, 1]} : vector<3x8x32xf32> to vector<3x8x8xf32>
    %52 = vector.extract_strided_slice %14 {offsets = [0, 0, 16], sizes = [3, 8, 8], strides = [1, 1, 1]} : vector<3x8x32xf32> to vector<3x8x8xf32>
    %53 = vector.extract_strided_slice %16 {offsets = [0, 0, 16], sizes = [3, 8, 8], strides = [1, 1, 1]} : vector<3x8x32xf32> to vector<3x8x8xf32>
    "tpu.trace_start"() <{level = 10 : i32, message = "nqd,nkd->nqk"}> : () -> ()
    %cst_18 = arith.constant dense<0.000000e+00> : vector<3x8x8xf32>
    %54 = tpu.matmul %51, %52, %cst_18 {dimension_numbers = #tpu.dot_dimension_numbers<[2], [2], [1], [1], [0, 0, 0, 1, 1, 1], [0], [0]>} : vector<3x8x8xf32>, vector<3x8x8xf32>, vector<3x8x8xf32> -> vector<3x8x8xf32>
    "tpu.trace_stop"() : () -> ()
    %cst_19 = arith.constant 0.353553385 : f32
    %55 = vector.broadcast %cst_19 : f32 to vector<3x8x8xf32>
    %56 = arith.mulf %54, %55 : vector<3x8x8xf32>
    %cst_20 = arith.constant dense<0xFF800000> : vector<3x8xf32>
    %57 = vector.multi_reduction <maximumf>, %56, %cst_20 [2] : vector<3x8x8xf32> to vector<3x8xf32>
    %58 = vector.shape_cast %57 : vector<3x8xf32> to vector<3x8x1xf32>
    %59 = vector.broadcast %58 : vector<3x8x1xf32> to vector<3x8x8xf32>
    %60 = arith.subf %56, %59 : vector<3x8x8xf32>
    %61 = math.exp %60 : vector<3x8x8xf32>
    %cst_21 = arith.constant dense<0.000000e+00> : vector<3x8xf32>
    %62 = vector.multi_reduction <add>, %61, %cst_21 [2] : vector<3x8x8xf32> to vector<3x8xf32>
    %63 = vector.shape_cast %62 : vector<3x8xf32> to vector<3x8x1xf32>
    %64 = tpu.reciprocal %63 : vector<3x8x1xf32> -> vector<3x8x1xf32>
    %65 = vector.broadcast %64 : vector<3x8x1xf32> to vector<3x8x8xf32>
    %66 = arith.mulf %61, %65 : vector<3x8x8xf32>
    "tpu.trace_start"() <{level = 10 : i32, message = "nqk,nkd->nqd"}> : () -> ()
    %cst_22 = arith.constant dense<0.000000e+00> : vector<3x8x8xf32>
    %67 = tpu.matmul %66, %53, %cst_22 {dimension_numbers = #tpu.dot_dimension_numbers<[2], [1], [1], [2], [0, 0, 0, 1, 1, 2], [0], [0]>} : vector<3x8x8xf32>, vector<3x8x8xf32>, vector<3x8x8xf32> -> vector<3x8x8xf32>
    "tpu.trace_stop"() : () -> ()
    %68 = vector.extract_strided_slice %12 {offsets = [0, 0, 24], sizes = [3, 8, 8], strides = [1, 1, 1]} : vector<3x8x32xf32> to vector<3x8x8xf32>
    %69 = vector.extract_strided_slice %14 {offsets = [0, 0, 24], sizes = [3, 8, 8], strides = [1, 1, 1]} : vector<3x8x32xf32> to vector<3x8x8xf32>
    %70 = vector.extract_strided_slice %16 {offsets = [0, 0, 24], sizes = [3, 8, 8], strides = [1, 1, 1]} : vector<3x8x32xf32> to vector<3x8x8xf32>
    "tpu.trace_start"() <{level = 10 : i32, message = "nqd,nkd->nqk"}> : () -> ()
    %cst_23 = arith.constant dense<0.000000e+00> : vector<3x8x8xf32>
    %71 = tpu.matmul %68, %69, %cst_23 {dimension_numbers = #tpu.dot_dimension_numbers<[2], [2], [1], [1], [0, 0, 0, 1, 1, 1], [0], [0]>} : vector<3x8x8xf32>, vector<3x8x8xf32>, vector<3x8x8xf32> -> vector<3x8x8xf32>
    "tpu.trace_stop"() : () -> ()
    %cst_24 = arith.constant 0.353553385 : f32
    %72 = vector.broadcast %cst_24 : f32 to vector<3x8x8xf32>
    %73 = arith.mulf %71, %72 : vector<3x8x8xf32>
    %cst_25 = arith.constant dense<0xFF800000> : vector<3x8xf32>
    %74 = vector.multi_reduction <maximumf>, %73, %cst_25 [2] : vector<3x8x8xf32> to vector<3x8xf32>
    %75 = vector.shape_cast %74 : vector<3x8xf32> to vector<3x8x1xf32>
    %76 = vector.broadcast %75 : vector<3x8x1xf32> to vector<3x8x8xf32>
    %77 = arith.subf %73, %76 : vector<3x8x8xf32>
    %78 = math.exp %77 : vector<3x8x8xf32>
    %cst_26 = arith.constant dense<0.000000e+00> : vector<3x8xf32>
    %79 = vector.multi_reduction <add>, %78, %cst_26 [2] : vector<3x8x8xf32> to vector<3x8xf32>
    %80 = vector.shape_cast %79 : vector<3x8xf32> to vector<3x8x1xf32>
    %81 = tpu.reciprocal %80 : vector<3x8x1xf32> -> vector<3x8x1xf32>
    %82 = vector.broadcast %81 : vector<3x8x1xf32> to vector<3x8x8xf32>
    %83 = arith.mulf %78, %82 : vector<3x8x8xf32>
    "tpu.trace_start"() <{level = 10 : i32, message = "nqk,nkd->nqd"}> : () -> ()
    %cst_27 = arith.constant dense<0.000000e+00> : vector<3x8x8xf32>
    %84 = tpu.matmul %83, %70, %cst_27 {dimension_numbers = #tpu.dot_dimension_numbers<[2], [1], [1], [2], [0, 0, 0, 1, 1, 2], [0], [0]>} : vector<3x8x8xf32>, vector<3x8x8xf32>, vector<3x8x8xf32> -> vector<3x8x8xf32>
    "tpu.trace_stop"() : () -> ()
    %85 = tpu.concatenate %33, %50, %67, %84 in 2 : vector<3x8x8xf32>, vector<3x8x8xf32>, vector<3x8x8xf32>, vector<3x8x8xf32> -> vector<3x8x32xf32>
    %86 = vector.shape_cast %85 : vector<3x8x32xf32> to vector<24x32xf32>
    %c0_28 = arith.constant 0 : index
    %c0_29 = arith.constant 0 : index
    %c0_30 = arith.constant 0 : index
    %87 = vector.load %arg5[%c0_28, %c0_29, %c0_30] : memref<1x32x32xf32, #tpu.memory_space<vmem>>, vector<1x32x32xf32>
    %88 = vector.shape_cast %87 : vector<1x32x32xf32> to vector<32x32xf32>
    %cst_31 = arith.constant dense<0.000000e+00> : vector<24x32xf32>
    %89 = tpu.matmul %86, %88, %cst_31 {dimension_numbers = #tpu.dot_dimension_numbers<[1], [0], [0], [1], [0, 0, 1, 1], [], []>} : vector<24x32xf32>, vector<32x32xf32>, vector<24x32xf32> -> vector<24x32xf32>
    %c0_32 = arith.constant 0 : index
    %c0_33 = arith.constant 0 : index
    %c0_34 = arith.constant 0 : index
    %90 = vector.load %arg6[%c0_32, %c0_33, %c0_34] : memref<1x1x32xf32, #tpu.memory_space<vmem>>, vector<1x1x32xf32>
    %91 = vector.shape_cast %90 : vector<1x1x32xf32> to vector<1x32xf32>
    %92 = vector.broadcast %91 : vector<1x32xf32> to vector<24x32xf32>
    %93 = arith.addf %89, %92 : vector<24x32xf32>
    %94 = arith.addf %3, %93 : vector<24x32xf32>
    %c0_35 = arith.constant 0 : index
    %c0_36 = arith.constant 0 : index
    %c0_37 = arith.constant 0 : index
    %95 = vector.load %arg7[%c0_35, %c0_36, %c0_37] : memref<1x1x32xf32, #tpu.memory_space<vmem>>, vector<1x1x32xf32>
    %96 = vector.shape_cast %95 : vector<1x1x32xf32> to vector<1x32xf32>
    %c0_38 = arith.constant 0 : index
    %c0_39 = arith.constant 0 : index
    %c0_40 = arith.constant 0 : index
    %97 = vector.load %arg8[%c0_38, %c0_39, %c0_40] : memref<1x1x32xf32, #tpu.memory_space<vmem>>, vector<1x1x32xf32>
    %98 = vector.shape_cast %97 : vector<1x1x32xf32> to vector<1x32xf32>
    %cst_41 = arith.constant dense<0.000000e+00> : vector<24xf32>
    %99 = vector.multi_reduction <add>, %94, %cst_41 [1] : vector<24x32xf32> to vector<24xf32>
    %100 = vector.shape_cast %99 : vector<24xf32> to vector<24x1xf32>
    %cst_42 = arith.constant 3.200000e+01 : f32
    %101 = vector.broadcast %cst_42 : f32 to vector<24x1xf32>
    %102 = arith.divf %100, %101 : vector<24x1xf32>
    %103 = vector.broadcast %102 : vector<24x1xf32> to vector<24x32xf32>
    %104 = arith.subf %94, %103 : vector<24x32xf32>
    %105 = arith.mulf %104, %104 : vector<24x32xf32>
    %cst_43 = arith.constant dense<0.000000e+00> : vector<24xf32>
    %106 = vector.multi_reduction <add>, %105, %cst_43 [1] : vector<24x32xf32> to vector<24xf32>
    %107 = vector.shape_cast %106 : vector<24xf32> to vector<24x1xf32>
    %cst_44 = arith.constant 3.200000e+01 : f32
    %108 = vector.broadcast %cst_44 : f32 to vector<24x1xf32>
    %109 = arith.divf %107, %108 : vector<24x1xf32>
    %110 = vector.broadcast %102 : vector<24x1xf32> to vector<24x32xf32>
    %111 = arith.subf %94, %110 : vector<24x32xf32>
    %cst_45 = arith.constant 9.99999974E-6 : f32
    %112 = vector.broadcast %cst_45 : f32 to vector<24x1xf32>
    %113 = arith.addf %109, %112 : vector<24x1xf32>
    %114 = math.rsqrt %113 : vector<24x1xf32>
    %115 = vector.broadcast %114 : vector<24x1xf32> to vector<24x32xf32>
    %116 = arith.mulf %111, %115 : vector<24x32xf32>
    %117 = vector.broadcast %96 : vector<1x32xf32> to vector<24x32xf32>
    %118 = arith.mulf %116, %117 : vector<24x32xf32>
    %119 = vector.broadcast %98 : vector<1x32xf32> to vector<24x32xf32>
    %120 = arith.addf %118, %119 : vector<24x32xf32>
    %c0_46 = arith.constant 0 : index
    %c0_47 = arith.constant 0 : index
    %c0_48 = arith.constant 0 : index
    %121 = vector.load %arg9[%c0_46, %c0_47, %c0_48] : memref<1x32x64xf32, #tpu.memory_space<vmem>>, vector<1x32x64xf32>
    %122 = vector.shape_cast %121 : vector<1x32x64xf32> to vector<32x64xf32>
    %cst_49 = arith.constant dense<0.000000e+00> : vector<24x64xf32>
    %123 = tpu.matmul %120, %122, %cst_49 {dimension_numbers = #tpu.dot_dimension_numbers<[1], [0], [0], [1], [0, 0, 1, 1], [], []>} : vector<24x32xf32>, vector<32x64xf32>, vector<24x64xf32> -> vector<24x64xf32>
    %c0_50 = arith.constant 0 : index
    %c0_51 = arith.constant 0 : index
    %c0_52 = arith.constant 0 : index
    %124 = vector.load %arg10[%c0_50, %c0_51, %c0_52] : memref<1x1x64xf32, #tpu.memory_space<vmem>>, vector<1x1x64xf32>
    %125 = vector.shape_cast %124 : vector<1x1x64xf32> to vector<1x64xf32>
    %126 = vector.broadcast %125 : vector<1x64xf32> to vector<24x64xf32>
    %127 = arith.addf %123, %126 : vector<24x64xf32>
    %cst_53 = arith.constant 0.000000e+00 : f32
    %128 = vector.broadcast %cst_53 : f32 to vector<24x64xf32>
    %129 = arith.maximumf %127, %128 : vector<24x64xf32>
    %c0_54 = arith.constant 0 : index
    %c0_55 = arith.constant 0 : index
    %c0_56 = arith.constant 0 : index
    %130 = vector.load %arg11[%c0_54, %c0_55, %c0_56] : memref<1x64x32xf32, #tpu.memory_space<vmem>>, vector<1x64x32xf32>
    %131 = vector.shape_cast %130 : vector<1x64x32xf32> to vector<64x32xf32>
    %cst_57 = arith.constant dense<0.000000e+00> : vector<24x32xf32>
    %132 = tpu.matmul %129, %131, %cst_57 {dimension_numbers = #tpu.dot_dimension_numbers<[1], [0], [0], [1], [0, 0, 1, 1], [], []>} : vector<24x64xf32>, vector<64x32xf32>, vector<24x32xf32> -> vector<24x32xf32>
    %c0_58 = arith.constant 0 : index
    %c0_59 = arith.constant 0 : index
    %c0_60 = arith.constant 0 : index
    %133 = vector.load %arg12[%c0_58, %c0_59, %c0_60] : memref<1x1x32xf32, #tpu.memory_space<vmem>>, vector<1x1x32xf32>
    %134 = vector.shape_cast %133 : vector<1x1x32xf32> to vector<1x32xf32>
    %135 = vector.broadcast %134 : vector<1x32xf32> to vector<24x32xf32>
    %136 = arith.addf %132, %135 : vector<24x32xf32>
    %137 = arith.addf %120, %136 : vector<24x32xf32>
    %c0_61 = arith.constant 0 : index
    %c0_62 = arith.constant 0 : index
    %c0_63 = arith.constant 0 : index
    %138 = vector.load %arg13[%c0_61, %c0_62, %c0_63] : memref<1x1x32xf32, #tpu.memory_space<vmem>>, vector<1x1x32xf32>
    %139 = vector.shape_cast %138 : vector<1x1x32xf32> to vector<1x32xf32>
    %c0_64 = arith.constant 0 : index
    %c0_65 = arith.constant 0 : index
    %c0_66 = arith.constant 0 : index
    %140 = vector.load %arg14[%c0_64, %c0_65, %c0_66] : memref<1x1x32xf32, #tpu.memory_space<vmem>>, vector<1x1x32xf32>
    %141 = vector.shape_cast %140 : vector<1x1x32xf32> to vector<1x32xf32>
    %cst_67 = arith.constant dense<0.000000e+00> : vector<24xf32>
    %142 = vector.multi_reduction <add>, %137, %cst_67 [1] : vector<24x32xf32> to vector<24xf32>
    %143 = vector.shape_cast %142 : vector<24xf32> to vector<24x1xf32>
    %cst_68 = arith.constant 3.200000e+01 : f32
    %144 = vector.broadcast %cst_68 : f32 to vector<24x1xf32>
    %145 = arith.divf %143, %144 : vector<24x1xf32>
    %146 = vector.broadcast %145 : vector<24x1xf32> to vector<24x32xf32>
    %147 = arith.subf %137, %146 : vector<24x32xf32>
    %148 = arith.mulf %147, %147 : vector<24x32xf32>
    %cst_69 = arith.constant dense<0.000000e+00> : vector<24xf32>
    %149 = vector.multi_reduction <add>, %148, %cst_69 [1] : vector<24x32xf32> to vector<24xf32>
    %150 = vector.shape_cast %149 : vector<24xf32> to vector<24x1xf32>
    %cst_70 = arith.constant 3.200000e+01 : f32
    %151 = vector.broadcast %cst_70 : f32 to vector<24x1xf32>
    %152 = arith.divf %150, %151 : vector<24x1xf32>
    %153 = vector.broadcast %145 : vector<24x1xf32> to vector<24x32xf32>
    %154 = arith.subf %137, %153 : vector<24x32xf32>
    %cst_71 = arith.constant 9.99999974E-6 : f32
    %155 = vector.broadcast %cst_71 : f32 to vector<24x1xf32>
    %156 = arith.addf %152, %155 : vector<24x1xf32>
    %157 = math.rsqrt %156 : vector<24x1xf32>
    %158 = vector.broadcast %157 : vector<24x1xf32> to vector<24x32xf32>
    %159 = arith.mulf %154, %158 : vector<24x32xf32>
    %160 = vector.broadcast %139 : vector<1x32xf32> to vector<24x32xf32>
    %161 = arith.mulf %159, %160 : vector<24x32xf32>
    %162 = vector.broadcast %141 : vector<1x32xf32> to vector<24x32xf32>
    %163 = arith.addf %161, %162 : vector<24x32xf32>
    %c0_72 = arith.constant 0 : index
    %c0_73 = arith.constant 0 : index
    %164 = vector.load %arg16[%c0_72, %c0_73] : memref<24x32xf32, #tpu.memory_space<vmem>>, vector<24x32xf32>
    tpu.vector_store %arg16[%c0_72, %c0_73], %163 {strides = array<i32>} : memref<24x32xf32, #tpu.memory_space<vmem>>, vector<24x32xf32>,
    %c2_i32 = arith.constant 2 : i32
    %165 = arith.cmpi eq, %arg1, %c2_i32 : i32
    %166 = arith.extui %165 : i1 to i32
    %c0_i32_74 = arith.constant 0 : i32
    %167 = arith.cmpi ne, %166, %c0_i32_74 : i32
    scf.if %167 {
      %168 = vector.extract_strided_slice %163 {offsets = [0, 0], sizes = [1, 32], strides = [1, 1]} : vector<24x32xf32> to vector<1x32xf32>
      %169 = vector.extract_strided_slice %163 {offsets = [8, 0], sizes = [1, 32], strides = [1, 1]} : vector<24x32xf32> to vector<1x32xf32>
      %170 = vector.extract_strided_slice %163 {offsets = [16, 0], sizes = [1, 32], strides = [1, 1]} : vector<24x32xf32> to vector<1x32xf32>
      %171 = tpu.concatenate %168, %169, %170 in 0 : vector<1x32xf32>, vector<1x32xf32>, vector<1x32xf32> -> vector<3x32xf32>
      %cst_75 = arith.constant 0.000000e+00 : f32
      %172 = vector.broadcast %cst_75 : f32 to vector<3x32xf32>
      %173 = arith.maximumf %171, %172 : vector<3x32xf32>
      %c0_76 = arith.constant 0 : index
      %c0_77 = arith.constant 0 : index
      %c0_78 = arith.constant 0 : index
      %174 = vector.load %arg15[%c0_76, %c0_77, %c0_78] : memref<1x3x32xf32, #tpu.memory_space<vmem>>, vector<1x3x32xf32>
      %175 = vector.shape_cast %174 : vector<1x3x32xf32> to vector<3x32xf32>
      %176 = vector.shape_cast %173 : vector<3x32xf32> to vector<1x3x32xf32>
      tpu.vector_store %arg15[%c0_76, %c0_77, %c0_78], %176 {strides = array<i32>} : memref<1x3x32xf32, #tpu.memory_space<vmem>>, vector<1x3x32xf32>,
    } else {
    }
    return
  }
  func.func @transform_0(%arg0: i32, %arg1: i32) -> (i32, i32, i32, i32) {
    %c0_i32 = arith.constant 0 : i32
    %c0_i32_0 = arith.constant 0 : i32
    %c0_i32_1 = arith.constant 0 : i32
    %c0_i32_2 = arith.constant 0 : i32
    return %arg0, %c0_i32, %c0_i32_0, %c0_i32_1 : i32, i32, i32, i32
  }
  func.func @transform_1(%arg0: i32, %arg1: i32) -> (i32, i32, i32) {
    %c0_i32 = arith.constant 0 : i32
    %c0_i32_0 = arith.constant 0 : i32
    %c0_i32_1 = arith.constant 0 : i32
    return %arg1, %c0_i32, %c0_i32_0 : i32, i32, i32
  }
  func.func @transform_2(%arg0: i32, %arg1: i32) -> (i32, i32, i32) {
    %c0_i32 = arith.constant 0 : i32
    %c0_i32_0 = arith.constant 0 : i32
    %c0_i32_1 = arith.constant 0 : i32
    return %arg1, %c0_i32, %c0_i32_0 : i32, i32, i32
  }
  func.func @transform_3(%arg0: i32, %arg1: i32) -> (i32, i32, i32) {
    %c0_i32 = arith.constant 0 : i32
    %c0_i32_0 = arith.constant 0 : i32
    %c0_i32_1 = arith.constant 0 : i32
    return %arg1, %c0_i32, %c0_i32_0 : i32, i32, i32
  }
  func.func @transform_4(%arg0: i32, %arg1: i32) -> (i32, i32, i32) {
    %c0_i32 = arith.constant 0 : i32
    %c0_i32_0 = arith.constant 0 : i32
    %c0_i32_1 = arith.constant 0 : i32
    return %arg1, %c0_i32, %c0_i32_0 : i32, i32, i32
  }
  func.func @transform_5(%arg0: i32, %arg1: i32) -> (i32, i32, i32) {
    %c0_i32 = arith.constant 0 : i32
    %c0_i32_0 = arith.constant 0 : i32
    %c0_i32_1 = arith.constant 0 : i32
    return %arg1, %c0_i32, %c0_i32_0 : i32, i32, i32
  }
  func.func @transform_6(%arg0: i32, %arg1: i32) -> (i32, i32, i32) {
    %c0_i32 = arith.constant 0 : i32
    %c0_i32_0 = arith.constant 0 : i32
    %c0_i32_1 = arith.constant 0 : i32
    return %arg1, %c0_i32, %c0_i32_0 : i32, i32, i32
  }
  func.func @transform_7(%arg0: i32, %arg1: i32) -> (i32, i32, i32) {
    %c0_i32 = arith.constant 0 : i32
    %c0_i32_0 = arith.constant 0 : i32
    %c0_i32_1 = arith.constant 0 : i32
    return %arg1, %c0_i32, %c0_i32_0 : i32, i32, i32
  }
  func.func @transform_8(%arg0: i32, %arg1: i32) -> (i32, i32, i32) {
    %c0_i32 = arith.constant 0 : i32
    %c0_i32_0 = arith.constant 0 : i32
    %c0_i32_1 = arith.constant 0 : i32
    return %arg1, %c0_i32, %c0_i32_0 : i32, i32, i32
  }
  func.func @transform_9(%arg0: i32, %arg1: i32) -> (i32, i32, i32) {
    %c0_i32 = arith.constant 0 : i32
    %c0_i32_0 = arith.constant 0 : i32
    %c0_i32_1 = arith.constant 0 : i32
    return %arg1, %c0_i32, %c0_i32_0 : i32, i32, i32
  }
  func.func @transform_10(%arg0: i32, %arg1: i32) -> (i32, i32, i32) {
    %c0_i32 = arith.constant 0 : i32
    %c0_i32_0 = arith.constant 0 : i32
    %c0_i32_1 = arith.constant 0 : i32
    return %arg1, %c0_i32, %c0_i32_0 : i32, i32, i32
  }
  func.func @transform_11(%arg0: i32, %arg1: i32) -> (i32, i32, i32) {
    %c0_i32 = arith.constant 0 : i32
    %c0_i32_0 = arith.constant 0 : i32
    %c0_i32_1 = arith.constant 0 : i32
    return %arg1, %c0_i32, %c0_i32_0 : i32, i32, i32
  }
  func.func @transform_12(%arg0: i32, %arg1: i32) -> (i32, i32, i32) {
    %c0_i32 = arith.constant 0 : i32
    %c0_i32_0 = arith.constant 0 : i32
    %c0_i32_1 = arith.constant 0 : i32
    return %arg1, %c0_i32, %c0_i32_0 : i32, i32, i32
  }
  func.func @transform_13(%arg0: i32, %arg1: i32) -> (i32, i32, i32) {
    %c0_i32 = arith.constant 0 : i32
    %c0_i32_0 = arith.constant 0 : i32
    %c0_i32_1 = arith.constant 0 : i32
    return %arg0, %c0_i32, %c0_i32_0 : i32, i32, i32
  }
}

</mosaic_0001>

<llo_original>
// kernel: tpu_custom_call.1
$region0: #{tpu_custom_call.1}
  #allocation0 [shape = 'u32[]', space=smem, size = 0x4, offset = 0x4, fixed_abs, tag = 'smem constant byte address 0x4 - core index']
  #allocation1 [shape = 'u32[72,128]{1,0:T(1,128)}', space=vmem, size = 0x9000, scoped, tag = 'internal scratch']
  #allocation2 [shape = 'f32[24,32]{1,0:T(8,128)}', space=vmem, size = 0x3000, scoped, tag = 'scratch operand']
  %s0 = inlined_call_operand.hbm [shape: f32[2,3,8,32], index: 0, kind: input, shape index: {}]
  %s1 = inlined_call_operand.vmem [shape: f32[3,32,96], index: 1, kind: input, shape index: {}]
  %s2 = inlined_call_operand.hbm [shape: f32[3,1,96], index: 2, kind: input, shape index: {}]
  %s3 = inlined_call_operand.vmem [shape: f32[3,32,32], index: 3, kind: input, shape index: {}]
  %s4 = inlined_call_operand.vmem [shape: f32[3,1,32], index: 4, kind: input, shape index: {}]
  %s5 = inlined_call_operand.hbm [shape: f32[3,1,32], index: 5, kind: input, shape index: {}]
  %s6 = inlined_call_operand.hbm [shape: f32[3,1,32], index: 6, kind: input, shape index: {}]
  %s7 = inlined_call_operand.vmem [shape: f32[3,32,64], index: 7, kind: input, shape index: {}]
  %s8 = inlined_call_operand.vmem [shape: f32[3,1,64], index: 8, kind: input, shape index: {}]
  %s9 = inlined_call_operand.vmem [shape: f32[3,64,32], index: 9, kind: input, shape index: {}]
  %s10 = inlined_call_operand.hbm [shape: f32[3,1,32], index: 10, kind: input, shape index: {}]
  %s11 = inlined_call_operand.hbm [shape: f32[3,1,32], index: 11, kind: input, shape index: {}]
  %s12 = inlined_call_operand.vmem [shape: f32[3,1,32], index: 12, kind: input, shape index: {}]
  %s13 = inlined_call_operand.vmem [shape: f32[2,3,32], index: 13, kind: output, shape index: {}]
  %s14 = sld [smem:[#allocation0]]
  $region117: #{tpu_custom_call.1} parent=0
    _
  %s16 = ssub.s32 1, %s14
  %s17 = scalar_select 0, %s16, %s14
  $region1: #{tpu_custom_call.1} parent=0
    #allocation3 [shape = 'u8[24576]{0}', space=vmem, size = 0x6000, scoped, tag = 'input window, operand 0']
    #allocation4 [shape = 's32[2]{0}', space=sflag, size = 0x8, scoped, tag = 'scoped memory for tpu_custom_call.1']
    #allocation5 [shape = 'u8[1024]{0}', space=vmem, size = 0x400, scoped, tag = 'input window, operand 2']
    #allocation6 [shape = 's32[2]{0}', space=sflag, size = 0x8, scoped, tag = 'scoped memory for tpu_custom_call.1']
    #allocation7 [shape = 'u8[1024]{0}', space=vmem, size = 0x400, scoped, tag = 'input window, operand 5']
    #allocation8 [shape = 'u8[1024]{0}', space=vmem, size = 0x400, scoped, tag = 'input window, operand 6']
    #allocation9 [shape = 's32[2]{0}', space=sflag, size = 0x8, scoped, tag = 'scoped memory for tpu_custom_call.1']
    #allocation10 [shape = 'u8[1024]{0}', space=vmem, size = 0x400, scoped, tag = 'input window, operand 10']
    #allocation11 [shape = 'u8[1024]{0}', space=vmem, size = 0x400, scoped, tag = 'input window, operand 11']
    #allocation12 [shape = 's32[2]{0}', space=sflag, size = 0x8, scoped, tag = 'scoped memory for tpu_custom_call.1']
    %18 = vsyncpa [#allocation4], 0
    %s19 = scalar_lea.sflag [#allocation4], 1
    %20 = vsyncpa %s19, 0
    %21 = vsyncpa [#allocation6], 0
    %s22 = scalar_lea.sflag [#allocation6], 1
    %23 = vsyncpa %s22, 0
    %24 = vsyncpa [#allocation9], 0
    %s25 = scalar_lea.sflag [#allocation9], 1
    %26 = vsyncpa %s25, 0
    %27 = vsyncpa [#allocation12], 0
    %s28 = scalar_lea.sflag [#allocation12], 1
    %29 = vsyncpa %s28, 0
    loop: start=0, step=1, limit=8
    $region2: #{tpu_custom_call.1} parent=1 // loop_pre_header
      _
    $region3: #{tpu_custom_call.1} parent=1 // loop_header
      %s31 = sphi 0, %s35
      %p32 = scmp.ge.s32.totalorder %s31, 8
      %s38 = sphi 0, %s50
      %s39 = sphi 0, %s46
      %s40 = sphi 0, %s38
      %s41 = sphi 0, %s39
      %s42 = sphi 0, %s40
      %s43 = sphi 0, %s41
      %s53 = sphi 0, %s55
      %s56 = sphi 0, %s53
      %s57 = sphi 0, %s56
      %s73 = sphi 0, %s57
      %s79 = sphi 0, %s81
      %s82 = sphi 0, %s79
      %s83 = sphi 0, %s82
      %s99 = sphi 0, %s83
      %s105 = sphi 0, %s107
      %s108 = sphi 0, %s105
      %s109 = sphi 0, %s108
      %s125 = sphi 0, %s109
      %s131 = sphi 0, %s133
      %s134 = sphi 0, %s131
      %s135 = sphi 0, %s134
      %s151 = sphi 0, %s135
      %s157 = sphi 0, %s159
      %s160 = sphi 0, %s157
      %s161 = sphi 0, %s160
      %s177 = sphi 0, %s161
      %s183 = sphi 0, %s185
      %s186 = sphi 0, %s183
      %s187 = sphi 0, %s186
      %s203 = sphi 0, %s187
      %s209 = sphi 0, %s211
      %s212 = sphi 0, %s209
      %s213 = sphi 0, %s212
      %s229 = sphi 0, %s213
      %s235 = sphi 0, %s237
      %s238 = sphi 0, %s235
      %s239 = sphi 0, %s238
      %s255 = sphi 0, %s239
      %s261 = sphi 0, %s263
      %s264 = sphi 0, %s261
      %s265 = sphi 0, %s264
      %s281 = sphi 0, %s265
      %s287 = sphi 0, %s289
      %s290 = sphi 0, %s287
      %s291 = sphi 0, %s290
      %s307 = sphi 0, %s291
      %s313 = sphi 0, %s315
      %s316 = sphi 0, %s313
      %s317 = sphi 0, %s316
      %s333 = sphi 0, %s317
      %s339 = sphi 0, %s341
      %s342 = sphi 0, %s339
      %s343 = sphi 0, %s342
      %s359 = sphi 0, %s343
      %s365 = sphi 0, %s367
      %s368 = sphi 0, %s365
      %s369 = sphi 0, %s368
      %s385 = sphi 0, %s369
      %s391 = sphi 0, %s393
      %s394 = sphi 0, %s391
      %s395 = sphi 0, %s394
      %s411 = sphi 0, %s395
    $region4: #{tpu_custom_call.1} parent=1 // loop_header_branch
      %34 = sbr.rel (%p32) target = $region8
    $region5: #{tpu_custom_call.1} parent=1 // loop_body
      %s36 = ssub.s32 %s31, 1
      %s37 = ssub.s32 %s31, 2
      %s44 = sadd.s32 1, %s39
      %p45 = scmp.ge.s32.totalorder %s44, 3
      %s46 = scalar_select %p45, 0, %s44
      %s47 = sadd.s32 1, %s38
      %s48 = scalar_select %p45, %s47, %s38
      %p49 = scmp.ge.s32.totalorder %s48, 2
      %s50 = scalar_select %p49, 0, %s48
      %s51 = ssub.s32 %s38, %s50
      %p52 = scmp.eq.s32.totalorder %s51, 0
      %s54 = sadd.s32 %s53, 1
      %s55 = scalar_select %p52, %s53, %s54
      %p58 = pneg %p52
      %p59 = scmp.eq.s32.totalorder %s31, 5
      %p60 = por %p58, %p59
      %p61 = scmp.ne.s32.totalorder %s53, %s56
      %p62 = scmp.eq.s32.totalorder %s31, 0
      %p63 = por %p61, %p62
      %p64 = scmp.ne.s32.totalorder %s53, %s56
      %p65 = scmp.eq.s32.totalorder %s36, 5
      %p66 = por %p64, %p65
      %p67 = scmp.ne.s32.totalorder %s56, %s57
      %p68 = scmp.eq.s32.totalorder %s36, 0
      %p69 = por %p67, %p68
      %p70 = scmp.ne.s32.totalorder %s56, %s57
      %p71 = scmp.eq.s32.totalorder %s37, 5
      %p72 = por %p70, %p71
      %p74 = scmp.ne.s32.totalorder %s57, %s73
      %p75 = scmp.eq.s32.totalorder %s37, 0
      %p76 = por %p74, %p75
      %s77 = ssub.s32 %s39, %s46
      %p78 = scmp.eq.s32.totalorder %s77, 0
      %s80 = sadd.s32 %s79, 1
      %s81 = scalar_select %p78, %s79, %s80
      %p84 = pneg %p78
      %p85 = scmp.eq.s32.totalorder %s31, 5
      %p86 = por %p84, %p85
      %p87 = scmp.ne.s32.totalorder %s79, %s82
      %p88 = scmp.eq.s32.totalorder %s31, 0
      %p89 = por %p87, %p88
      %p90 = scmp.ne.s32.totalorder %s79, %s82
      %p91 = scmp.eq.s32.totalorder %s36, 5
      %p92 = por %p90, %p91
      %p93 = scmp.ne.s32.totalorder %s82, %s83
      %p94 = scmp.eq.s32.totalorder %s36, 0
      %p95 = por %p93, %p94
      %p96 = scmp.ne.s32.totalorder %s82, %s83
      %p97 = scmp.eq.s32.totalorder %s37, 5
      %p98 = por %p96, %p97
      %p100 = scmp.ne.s32.totalorder %s83, %s99
      %p101 = scmp.eq.s32.totalorder %s37, 0
      %p102 = por %p100, %p101
      %s103 = ssub.s32 %s39, %s46
      %p104 = scmp.eq.s32.totalorder %s103, 0
      %s106 = sadd.s32 %s105, 1
      %s107 = scalar_select %p104, %s105, %s106
      %p110 = pneg %p104
      %p111 = scmp.eq.s32.totalorder %s31, 5
      %p112 = por %p110, %p111
      %p113 = scmp.ne.s32.totalorder %s105, %s108
      %p114 = scmp.eq.s32.totalorder %s31, 0
      %p115 = por %p113, %p114
      %p116 = scmp.ne.s32.totalorder %s105, %s108
      %p117 = scmp.eq.s32.totalorder %s36, 5
      %p118 = por %p116, %p117
      %p119 = scmp.ne.s32.totalorder %s108, %s109
      %p120 = scmp.eq.s32.totalorder %s36, 0
      %p121 = por %p119, %p120
      %p122 = scmp.ne.s32.totalorder %s108, %s109
      %p123 = scmp.eq.s32.totalorder %s37, 5
      %p124 = por %p122, %p123
      %p126 = scmp.ne.s32.totalorder %s109, %s125
      %p127 = scmp.eq.s32.totalorder %s37, 0
      %p128 = por %p126, %p127
      %s129 = ssub.s32 %s39, %s46
      %p130 = scmp.eq.s32.totalorder %s129, 0
      %s132 = sadd.s32 %s131, 1
      %s133 = scalar_select %p130, %s131, %s132
      %p136 = pneg %p130
      %p137 = scmp.eq.s32.totalorder %s31, 5
      %p138 = por %p136, %p137
      %p139 = scmp.ne.s32.totalorder %s131, %s134
      %p140 = scmp.eq.s32.totalorder %s31, 0
      %p141 = por %p139, %p140
      %p142 = scmp.ne.s32.totalorder %s131, %s134
      %p143 = scmp.eq.s32.totalorder %s36, 5
      %p144 = por %p142, %p143
      %p145 = scmp.ne.s32.totalorder %s134, %s135
      %p146 = scmp.eq.s32.totalorder %s36, 0
      %p147 = por %p145, %p146
      %p148 = scmp.ne.s32.totalorder %s134, %s135
      %p149 = scmp.eq.s32.totalorder %s37, 5
      %p150 = por %p148, %p149
      %p152 = scmp.ne.s32.totalorder %s135, %s151
      %p153 = scmp.eq.s32.totalorder %s37, 0
      %p154 = por %p152, %p153
      %s155 = ssub.s32 %s39, %s46
      %p156 = scmp.eq.s32.totalorder %s155, 0
      %s158 = sadd.s32 %s157, 1
      %s159 = scalar_select %p156, %s157, %s158
      %p162 = pneg %p156
      %p163 = scmp.eq.s32.totalorder %s31, 5
      %p164 = por %p162, %p163
      %p165 = scmp.ne.s32.totalorder %s157, %s160
      %p166 = scmp.eq.s32.totalorder %s31, 0
      %p167 = por %p165, %p166
      %p168 = scmp.ne.s32.totalorder %s157, %s160
      %p169 = scmp.eq.s32.totalorder %s36, 5
      %p170 = por %p168, %p169
      %p171 = scmp.ne.s32.totalorder %s160, %s161
      %p172 = scmp.eq.s32.totalorder %s36, 0
      %p173 = por %p171, %p172
      %p174 = scmp.ne.s32.totalorder %s160, %s161
      %p175 = scmp.eq.s32.totalorder %s37, 5
      %p176 = por %p174, %p175
      %p178 = scmp.ne.s32.totalorder %s161, %s177
      %p179 = scmp.eq.s32.totalorder %s37, 0
      %p180 = por %p178, %p179
      %s181 = ssub.s32 %s39, %s46
      %p182 = scmp.eq.s32.totalorder %s181, 0
      %s184 = sadd.s32 %s183, 1
      %s185 = scalar_select %p182, %s183, %s184
      %p188 = pneg %p182
      %p189 = scmp.eq.s32.totalorder %s31, 5
      %p190 = por %p188, %p189
      %p191 = scmp.ne.s32.totalorder %s183, %s186
      %p192 = scmp.eq.s32.totalorder %s31, 0
      %p193 = por %p191, %p192
      %p194 = scmp.ne.s32.totalorder %s183, %s186
      %p195 = scmp.eq.s32.totalorder %s36, 5
      %p196 = por %p194, %p195
      %p197 = scmp.ne.s32.totalorder %s186, %s187
      %p198 = scmp.eq.s32.totalorder %s36, 0
      %p199 = por %p197, %p198
      %p200 = scmp.ne.s32.totalorder %s186, %s187
      %p201 = scmp.eq.s32.totalorder %s37, 5
      %p202 = por %p200, %p201
      %p204 = scmp.ne.s32.totalorder %s187, %s203
      %p205 = scmp.eq.s32.totalorder %s37, 0
      %p206 = por %p204, %p205
      %s207 = ssub.s32 %s39, %s46
      %p208 = scmp.eq.s32.totalorder %s207, 0
      %s210 = sadd.s32 %s209, 1
      %s211 = scalar_select %p208, %s209, %s210
      %p214 = pneg %p208
      %p215 = scmp.eq.s32.totalorder %s31, 5
      %p216 = por %p214, %p215
      %p217 = scmp.ne.s32.totalorder %s209, %s212
      %p218 = scmp.eq.s32.totalorder %s31, 0
      %p219 = por %p217, %p218
      %p220 = scmp.ne.s32.totalorder %s209, %s212
      %p221 = scmp.eq.s32.totalorder %s36, 5
      %p222 = por %p220, %p221
      %p223 = scmp.ne.s32.totalorder %s212, %s213
      %p224 = scmp.eq.s32.totalorder %s36, 0
      %p225 = por %p223, %p224
      %p226 = scmp.ne.s32.totalorder %s212, %s213
      %p227 = scmp.eq.s32.totalorder %s37, 5
      %p228 = por %p226, %p227
      %p230 = scmp.ne.s32.totalorder %s213, %s229
      %p231 = scmp.eq.s32.totalorder %s37, 0
      %p232 = por %p230, %p231
      %s233 = ssub.s32 %s39, %s46
      %p234 = scmp.eq.s32.totalorder %s233, 0
      %s236 = sadd.s32 %s235, 1
      %s237 = scalar_select %p234, %s235, %s236
      %p240 = pneg %p234
      %p241 = scmp.eq.s32.totalorder %s31, 5
      %p242 = por %p240, %p241
      %p243 = scmp.ne.s32.totalorder %s235, %s238
      %p244 = scmp.eq.s32.totalorder %s31, 0
      %p245 = por %p243, %p244
      %p246 = scmp.ne.s32.totalorder %s235, %s238
      %p247 = scmp.eq.s32.totalorder %s36, 5
      %p248 = por %p246, %p247
      %p249 = scmp.ne.s32.totalorder %s238, %s239
      %p250 = scmp.eq.s32.totalorder %s36, 0
      %p251 = por %p249, %p250
      %p252 = scmp.ne.s32.totalorder %s238, %s239
      %p253 = scmp.eq.s32.totalorder %s37, 5
      %p254 = por %p252, %p253
      %p256 = scmp.ne.s32.totalorder %s239, %s255
      %p257 = scmp.eq.s32.totalorder %s37, 0
      %p258 = por %p256, %p257
      %s259 = ssub.s32 %s39, %s46
      %p260 = scmp.eq.s32.totalorder %s259, 0
      %s262 = sadd.s32 %s261, 1
      %s263 = scalar_select %p260, %s261, %s262
      %p266 = pneg %p260
      %p267 = scmp.eq.s32.totalorder %s31, 5
      %p268 = por %p266, %p267
      %p269 = scmp.ne.s32.totalorder %s261, %s264
      %p270 = scmp.eq.s32.totalorder %s31, 0
      %p271 = por %p269, %p270
      %p272 = scmp.ne.s32.totalorder %s261, %s264
      %p273 = scmp.eq.s32.totalorder %s36, 5
      %p274 = por %p272, %p273
      %p275 = scmp.ne.s32.totalorder %s264, %s265
      %p276 = scmp.eq.s32.totalorder %s36, 0
      %p277 = por %p275, %p276
      %p278 = scmp.ne.s32.totalorder %s264, %s265
      %p279 = scmp.eq.s32.totalorder %s37, 5
      %p280 = por %p278, %p279
      %p282 = scmp.ne.s32.totalorder %s265, %s281
      %p283 = scmp.eq.s32.totalorder %s37, 0
      %p284 = por %p282, %p283
      %s285 = ssub.s32 %s39, %s46
      %p286 = scmp.eq.s32.totalorder %s285, 0
      %s288 = sadd.s32 %s287, 1
      %s289 = scalar_select %p286, %s287, %s288
      %p292 = pneg %p286
      %p293 = scmp.eq.s32.totalorder %s31, 5
      %p294 = por %p292, %p293
      %p295 = scmp.ne.s32.totalorder %s287, %s290
      %p296 = scmp.eq.s32.totalorder %s31, 0
      %p297 = por %p295, %p296
      %p298 = scmp.ne.s32.totalorder %s287, %s290
      %p299 = scmp.eq.s32.totalorder %s36, 5
      %p300 = por %p298, %p299
      %p301 = scmp.ne.s32.totalorder %s290, %s291
      %p302 = scmp.eq.s32.totalorder %s36, 0
      %p303 = por %p301, %p302
      %p304 = scmp.ne.s32.totalorder %s290, %s291
      %p305 = scmp.eq.s32.totalorder %s37, 5
      %p306 = por %p304, %p305
      %p308 = scmp.ne.s32.totalorder %s291, %s307
      %p309 = scmp.eq.s32.totalorder %s37, 0
      %p310 = por %p308, %p309
      %s311 = ssub.s32 %s39, %s46
      %p312 = scmp.eq.s32.totalorder %s311, 0
      %s314 = sadd.s32 %s313, 1
      %s315 = scalar_select %p312, %s313, %s314
      %p318 = pneg %p312
      %p319 = scmp.eq.s32.totalorder %s31, 5
      %p320 = por %p318, %p319
      %p321 = scmp.ne.s32.totalorder %s313, %s316
      %p322 = scmp.eq.s32.totalorder %s31, 0
      %p323 = por %p321, %p322
      %p324 = scmp.ne.s32.totalorder %s313, %s316
      %p325 = scmp.eq.s32.totalorder %s36, 5
      %p326 = por %p324, %p325
      %p327 = scmp.ne.s32.totalorder %s316, %s317
      %p328 = scmp.eq.s32.totalorder %s36, 0
      %p329 = por %p327, %p328
      %p330 = scmp.ne.s32.totalorder %s316, %s317
      %p331 = scmp.eq.s32.totalorder %s37, 5
      %p332 = por %p330, %p331
      %p334 = scmp.ne.s32.totalorder %s317, %s333
      %p335 = scmp.eq.s32.totalorder %s37, 0
      %p336 = por %p334, %p335
      %s337 = ssub.s32 %s39, %s46
      %p338 = scmp.eq.s32.totalorder %s337, 0
      %s340 = sadd.s32 %s339, 1
      %s341 = scalar_select %p338, %s339, %s340
      %p344 = pneg %p338
      %p345 = scmp.eq.s32.totalorder %s31, 5
      %p346 = por %p344, %p345
      %p347 = scmp.ne.s32.totalorder %s339, %s342
      %p348 = scmp.eq.s32.totalorder %s31, 0
      %p349 = por %p347, %p348
      %p350 = scmp.ne.s32.totalorder %s339, %s342
      %p351 = scmp.eq.s32.totalorder %s36, 5
      %p352 = por %p350, %p351
      %p353 = scmp.ne.s32.totalorder %s342, %s343
      %p354 = scmp.eq.s32.totalorder %s36, 0
      %p355 = por %p353, %p354
      %p356 = scmp.ne.s32.totalorder %s342, %s343
      %p357 = scmp.eq.s32.totalorder %s37, 5
      %p358 = por %p356, %p357
      %p360 = scmp.ne.s32.totalorder %s343, %s359
      %p361 = scmp.eq.s32.totalorder %s37, 0
      %p362 = por %p360, %p361
      %s363 = ssub.s32 %s39, %s46
      %p364 = scmp.eq.s32.totalorder %s363, 0
      %s366 = sadd.s32 %s365, 1
      %s367 = scalar_select %p364, %s365, %s366
      %p370 = pneg %p364
      %p371 = scmp.eq.s32.totalorder %s31, 5
      %p372 = por %p370, %p371
      %p373 = scmp.ne.s32.totalorder %s365, %s368
      %p374 = scmp.eq.s32.totalorder %s31, 0
      %p375 = por %p373, %p374
      %p376 = scmp.ne.s32.totalorder %s365, %s368
      %p377 = scmp.eq.s32.totalorder %s36, 5
      %p378 = por %p376, %p377
      %p379 = scmp.ne.s32.totalorder %s368, %s369
      %p380 = scmp.eq.s32.totalorder %s36, 0
      %p381 = por %p379, %p380
      %p382 = scmp.ne.s32.totalorder %s368, %s369
      %p383 = scmp.eq.s32.totalorder %s37, 5
      %p384 = por %p382, %p383
      %p386 = scmp.ne.s32.totalorder %s369, %s385
      %p387 = scmp.eq.s32.totalorder %s37, 0
      %p388 = por %p386, %p387
      %s389 = ssub.s32 %s38, %s50
      %p390 = scmp.eq.s32.totalorder %s389, 0
      %s392 = sadd.s32 %s391, 1
      %s393 = scalar_select %p390, %s391, %s392
      %p396 = pneg %p390
      %p397 = scmp.eq.s32.totalorder %s31, 5
      %p398 = por %p396, %p397
      %p399 = scmp.ne.s32.totalorder %s391, %s394
      %p400 = scmp.eq.s32.totalorder %s31, 0
      %p401 = por %p399, %p400
      %p402 = scmp.ne.s32.totalorder %s391, %s394
      %p403 = scmp.eq.s32.totalorder %s36, 5
      %p404 = por %p402, %p403
      %p405 = scmp.ne.s32.totalorder %s394, %s395
      %p406 = scmp.eq.s32.totalorder %s36, 0
      %p407 = por %p405, %p406
      %p408 = scmp.ne.s32.totalorder %s394, %s395
      %p409 = scmp.eq.s32.totalorder %s37, 5
      %p410 = por %p408, %p409
      %p412 = scmp.ne.s32.totalorder %s395, %s411
      %p413 = scmp.eq.s32.totalorder %s37, 0
      %p414 = por %p412, %p413
      %p415 = scmp.le.s32.totalorder 1, %s31
      %p416 = scmp.lt.s32.totalorder %s31, 7
      %p417 = pnand %p415, %p416
      %p418 = pneg %p417
      // Predicated region
      $region9: #{tpu_custom_call.1} parent=5 // pred_check
        _
      $region10: #{tpu_custom_call.1} parent=5 // pred_check_branch
        %420 = sbr.rel (%p417) target = $region12
      $region11: #{tpu_custom_call.1} parent=5 // pred_region
        %s421 = ssub.s32 %s31, 1
      $region12: #{tpu_custom_call.1} parent=5 // pred_fallthru
        _
      %p422 = scmp.lt.s32.totalorder %s31, 6
      // Predicated region
      $region13: #{tpu_custom_call.1} parent=5 // pred_check
        %p423 = pneg %p422
      $region14: #{tpu_custom_call.1} parent=5 // pred_check_branch
        %425 = sbr.rel (%p423) target = $region16
      $region15: #{tpu_custom_call.1} parent=5 // pred_region
        // Predicated region
        $region17: #{tpu_custom_call.1} parent=15 // pred_check
          %p426 = pneg %p63
        $region18: #{tpu_custom_call.1} parent=15 // pred_check_branch
          %428 = sbr.rel (%p426) target = $region20
        $region19: #{tpu_custom_call.1} parent=15 // pred_region
          %s429 = sand.u32 %s53, 1
          %s430 = scalar_lea.sflag [#allocation4], %s429
          %s431 = sand.u32 %s53, 1
          %s432 = smul.addr %s431, 24
          %s433 = scalar_lea.vmem [#allocation3], %s432
          %435 = vsyncadd %s430, 0
          %s436 = smul.addr %s38, 3
          %s437 = smul.addr %s436, 8
          %s438 = scalar_lea.hbm %s0, %s437
          %s439 = sshll.u32 %s438, 4
          %s440 = int_to_ptr.hbm [resolvable:$true] %s439
          %s441 = sshll.u32 %s433, 4
          %s442 = int_to_ptr.vmem [resolvable:$true] %s441
          %447 = dma.hbm_to_vmem [thread:$0]  %s440, 384, %s442, %s430, 128, 128, 8
        $region20: #{tpu_custom_call.1} parent=15 // pred_fallthru
          _
        // Predicated region
        $region21: #{tpu_custom_call.1} parent=15 // pred_check
          %p448 = pneg %p89
        $region22: #{tpu_custom_call.1} parent=15 // pred_check_branch
          %450 = sbr.rel (%p448) target = $region24
        $region23: #{tpu_custom_call.1} parent=15 // pred_region
          %p451 = scmp.lt.s32.totalorder %s39, 2
          %s452 = scalar_select %p451, %s39, 2
          %s453 = smul.addr %s452, 4
          %s454 = smul.addr %s453, 8
          %s455 = scalar_lea.vmem %s1, %s454
        $region24: #{tpu_custom_call.1} parent=15 // pred_fallthru
          _
        // Predicated region
        $region25: #{tpu_custom_call.1} parent=15 // pred_check
          %p456 = pneg %p115
        $region26: #{tpu_custom_call.1} parent=15 // pred_check_branch
          %458 = sbr.rel (%p456) target = $region28
        $region27: #{tpu_custom_call.1} parent=15 // pred_region
          %s459 = sand.u32 %s31, 1
          %s460 = scalar_lea.sflag [#allocation6], %s459
          %s461 = sand.u32 %s105, 1
          %s462 = scalar_lea.vmem [#allocation5], %s461
          %464 = vsyncadd %s460, 0
          %s465 = scalar_lea.hbm %s2, %s39
          %s467 = sshll.u32 %s465, 4
          %s468 = int_to_ptr.hbm [resolvable:$true] %s467
          %s469 = sshll.u32 %s462, 4
          %s470 = int_to_ptr.vmem [resolvable:$true] %s469
          %472 = dma.hbm_to_vmem [thread:$0]  %s468, 16, %s470, %s460
        $region28: #{tpu_custom_call.1} parent=15 // pred_fallthru
          _
        // Predicated region
        $region29: #{tpu_custom_call.1} parent=15 // pred_check
          %p473 = pneg %p141
        $region30: #{tpu_custom_call.1} parent=15 // pred_check_branch
          %475 = sbr.rel (%p473) target = $region32
        $region31: #{tpu_custom_call.1} parent=15 // pred_region
          %p476 = scmp.lt.s32.totalorder %s39, 2
          %s477 = scalar_select %p476, %s39, 2
          %s478 = smul.addr %s477, 4
          %s479 = smul.addr %s478, 8
          %s480 = scalar_lea.vmem %s3, %s479
        $region32: #{tpu_custom_call.1} parent=15 // pred_fallthru
          _
        // Predicated region
        $region33: #{tpu_custom_call.1} parent=15 // pred_check
          %p481 = pneg %p167
        $region34: #{tpu_custom_call.1} parent=15 // pred_check_branch
          %483 = sbr.rel (%p481) target = $region36
        $region35: #{tpu_custom_call.1} parent=15 // pred_region
          %p484 = scmp.lt.s32.totalorder %s39, 2
          %s485 = scalar_select %p484, %s39, 2
          %s486 = scalar_lea.vmem %s4, %s485
        $region36: #{tpu_custom_call.1} parent=15 // pred_fallthru
          _
        // Predicated region
        $region37: #{tpu_custom_call.1} parent=15 // pred_check
          %p487 = pneg %p193
        $region38: #{tpu_custom_call.1} parent=15 // pred_check_branch
          %489 = sbr.rel (%p487) target = $region40
        $region39: #{tpu_custom_call.1} parent=15 // pred_region
          %s490 = sand.u32 %s31, 1
          %s491 = scalar_lea.sflag [#allocation6], %s490
          %s492 = sand.u32 %s183, 1
          %s493 = scalar_lea.vmem [#allocation7], %s492
          %495 = vsyncadd %s491, 0
          %s496 = scalar_lea.hbm %s5, %s39
          %s498 = sshll.u32 %s496, 4
          %s499 = int_to_ptr.hbm [resolvable:$true] %s498
          %s500 = sshll.u32 %s493, 4
          %s501 = int_to_ptr.vmem [resolvable:$true] %s500
          %503 = dma.hbm_to_vmem [thread:$0]  %s499, 16, %s501, %s491
        $region40: #{tpu_custom_call.1} parent=15 // pred_fallthru
          _
        // Predicated region
        $region41: #{tpu_custom_call.1} parent=15 // pred_check
          %p504 = pneg %p219
        $region42: #{tpu_custom_call.1} parent=15 // pred_check_branch
          %506 = sbr.rel (%p504) target = $region44
        $region43: #{tpu_custom_call.1} parent=15 // pred_region
          %s507 = sand.u32 %s31, 1
          %s508 = scalar_lea.sflag [#allocation9], %s507
          %s509 = sand.u32 %s209, 1
          %s510 = scalar_lea.vmem [#allocation8], %s509
          %512 = vsyncadd %s508, 0
          %s513 = scalar_lea.hbm %s6, %s39
          %s515 = sshll.u32 %s513, 4
          %s516 = int_to_ptr.hbm [resolvable:$true] %s515
          %s517 = sshll.u32 %s510, 4
          %s518 = int_to_ptr.vmem [resolvable:$true] %s517
          %520 = dma.hbm_to_vmem [thread:$0]  %s516, 16, %s518, %s508
        $region44: #{tpu_custom_call.1} parent=15 // pred_fallthru
          _
        // Predicated region
        $region45: #{tpu_custom_call.1} parent=15 // pred_check
          %p521 = pneg %p245
        $region46: #{tpu_custom_call.1} parent=15 // pred_check_branch
          %523 = sbr.rel (%p521) target = $region48
        $region47: #{tpu_custom_call.1} parent=15 // pred_region
          %p524 = scmp.lt.s32.totalorder %s39, 2
          %s525 = scalar_select %p524, %s39, 2
          %s526 = smul.addr %s525, 4
          %s527 = smul.addr %s526, 8
          %s528 = scalar_lea.vmem %s7, %s527
        $region48: #{tpu_custom_call.1} parent=15 // pred_fallthru
          _
        // Predicated region
        $region49: #{tpu_custom_call.1} parent=15 // pred_check
          %p529 = pneg %p271
        $region50: #{tpu_custom_call.1} parent=15 // pred_check_branch
          %531 = sbr.rel (%p529) target = $region52
        $region51: #{tpu_custom_call.1} parent=15 // pred_region
          %p532 = scmp.lt.s32.totalorder %s39, 2
          %s533 = scalar_select %p532, %s39, 2
          %s534 = scalar_lea.vmem %s8, %s533
        $region52: #{tpu_custom_call.1} parent=15 // pred_fallthru
          _
        // Predicated region
        $region53: #{tpu_custom_call.1} parent=15 // pred_check
          %p535 = pneg %p297
        $region54: #{tpu_custom_call.1} parent=15 // pred_check_branch
          %537 = sbr.rel (%p535) target = $region56
        $region55: #{tpu_custom_call.1} parent=15 // pred_region
          %p538 = scmp.lt.s32.totalorder %s39, 2
          %s539 = scalar_select %p538, %s39, 2
          %s540 = smul.addr %s539, 8
          %s541 = smul.addr %s540, 8
          %s542 = scalar_lea.vmem %s9, %s541
        $region56: #{tpu_custom_call.1} parent=15 // pred_fallthru
          _
        // Predicated region
        $region57: #{tpu_custom_call.1} parent=15 // pred_check
          %p543 = pneg %p323
        $region58: #{tpu_custom_call.1} parent=15 // pred_check_branch
          %545 = sbr.rel (%p543) target = $region60
        $region59: #{tpu_custom_call.1} parent=15 // pred_region
          %s546 = sand.u32 %s31, 1
          %s547 = scalar_lea.sflag [#allocation9], %s546
          %s548 = sand.u32 %s313, 1
          %s549 = scalar_lea.vmem [#allocation10], %s548
          %551 = vsyncadd %s547, 0
          %s552 = scalar_lea.hbm %s10, %s39
          %s554 = sshll.u32 %s552, 4
          %s555 = int_to_ptr.hbm [resolvable:$true] %s554
          %s556 = sshll.u32 %s549, 4
          %s557 = int_to_ptr.vmem [resolvable:$true] %s556
          %559 = dma.hbm_to_vmem [thread:$0]  %s555, 16, %s557, %s547
        $region60: #{tpu_custom_call.1} parent=15 // pred_fallthru
          _
        // Predicated region
        $region61: #{tpu_custom_call.1} parent=15 // pred_check
          %p560 = pneg %p349
        $region62: #{tpu_custom_call.1} parent=15 // pred_check_branch
          %562 = sbr.rel (%p560) target = $region64
        $region63: #{tpu_custom_call.1} parent=15 // pred_region
          %s563 = sand.u32 %s339, 1
          %s564 = scalar_lea.sflag [#allocation12], %s563
          %s565 = sand.u32 %s339, 1
          %s566 = scalar_lea.vmem [#allocation11], %s565
          %568 = vsyncadd %s564, 0
          %s569 = scalar_lea.hbm %s11, %s39
          %s571 = sshll.u32 %s569, 4
          %s572 = int_to_ptr.hbm [resolvable:$true] %s571
          %s573 = sshll.u32 %s566, 4
          %s574 = int_to_ptr.vmem [resolvable:$true] %s573
          %576 = dma.hbm_to_vmem [thread:$0]  %s572, 16, %s574, %s564
        $region64: #{tpu_custom_call.1} parent=15 // pred_fallthru
          _
        // Predicated region
        $region65: #{tpu_custom_call.1} parent=15 // pred_check
          %p577 = pneg %p375
        $region66: #{tpu_custom_call.1} parent=15 // pred_check_branch
          %579 = sbr.rel (%p577) target = $region68
        $region67: #{tpu_custom_call.1} parent=15 // pred_region
          %p580 = scmp.lt.s32.totalorder %s39, 2
          %s581 = scalar_select %p580, %s39, 2
          %s582 = scalar_lea.vmem %s12, %s581
        $region68: #{tpu_custom_call.1} parent=15 // pred_fallthru
          _
      $region16: #{tpu_custom_call.1} parent=5 // pred_fallthru
        _
      %p583 = scmp.le.s32.totalorder 1, %s31
      %p584 = scmp.lt.s32.totalorder %s31, 7
      %p585 = pnand %p583, %p584
      %p586 = pneg %p585
      // Predicated region
      $region69: #{tpu_custom_call.1} parent=5 // pred_check
        _
      $region70: #{tpu_custom_call.1} parent=5 // pred_check_branch
        %588 = sbr.rel (%p585) target = $region72
      $region71: #{tpu_custom_call.1} parent=5 // pred_region
        %s589 = ssub.s32 %s31, 1
        %s590 = sand.u32 %s56, 1
        %s591 = scalar_lea.sflag [#allocation4], %s590
        %s592 = sand.u32 %s56, 1
        %s593 = smul.addr %s592, 24
        %s594 = scalar_lea.vmem [#allocation3], %s593
        // Predicated region
        $region73: #{tpu_custom_call.1} parent=71 // pred_check
          %p595 = pneg %p69
        $region74: #{tpu_custom_call.1} parent=71 // pred_check_branch
          %597 = sbr.rel (%p595) target = $region76
        $region75: #{tpu_custom_call.1} parent=71 // pred_region
          %599 = dma.done %s591, 384
        $region76: #{tpu_custom_call.1} parent=71 // pred_fallthru
          _
        %s600 = sand.u32 %s36, 1
        %s601 = scalar_lea.sflag [#allocation6], %s600
        %s602 = sand.u32 %s108, 1
        %s603 = scalar_lea.vmem [#allocation5], %s602
        // Predicated region
        $region77: #{tpu_custom_call.1} parent=71 // pred_check
          %p604 = pneg %p121
        $region78: #{tpu_custom_call.1} parent=71 // pred_check_branch
          %606 = sbr.rel (%p604) target = $region80
        $region79: #{tpu_custom_call.1} parent=71 // pred_region
          %608 = dma.done %s601, 16
        $region80: #{tpu_custom_call.1} parent=71 // pred_fallthru
          _
        %s609 = sand.u32 %s36, 1
        %s610 = scalar_lea.sflag [#allocation6], %s609
        %s611 = sand.u32 %s186, 1
        %s612 = scalar_lea.vmem [#allocation7], %s611
        // Predicated region
        $region81: #{tpu_custom_call.1} parent=71 // pred_check
          %p613 = pneg %p199
        $region82: #{tpu_custom_call.1} parent=71 // pred_check_branch
          %615 = sbr.rel (%p613) target = $region84
        $region83: #{tpu_custom_call.1} parent=71 // pred_region
          %617 = dma.done %s610, 16
        $region84: #{tpu_custom_call.1} parent=71 // pred_fallthru
          _
        %s618 = sand.u32 %s36, 1
        %s619 = scalar_lea.sflag [#allocation9], %s618
        %s620 = sand.u32 %s212, 1
        %s621 = scalar_lea.vmem [#allocation8], %s620
        // Predicated region
        $region85: #{tpu_custom_call.1} parent=71 // pred_check
          %p622 = pneg %p225
        $region86: #{tpu_custom_call.1} parent=71 // pred_check_branch
          %624 = sbr.rel (%p622) target = $region88
        $region87: #{tpu_custom_call.1} parent=71 // pred_region
          %626 = dma.done %s619, 16
        $region88: #{tpu_custom_call.1} parent=71 // pred_fallthru
          _
        %s627 = sand.u32 %s36, 1
        %s628 = scalar_lea.sflag [#allocation9], %s627
        %s629 = sand.u32 %s316, 1
        %s630 = scalar_lea.vmem [#allocation10], %s629
        // Predicated region
        $region89: #{tpu_custom_call.1} parent=71 // pred_check
          %p631 = pneg %p329
        $region90: #{tpu_custom_call.1} parent=71 // pred_check_branch
          %633 = sbr.rel (%p631) target = $region92
        $region91: #{tpu_custom_call.1} parent=71 // pred_region
          %635 = dma.done %s628, 16
        $region92: #{tpu_custom_call.1} parent=71 // pred_fallthru
          _
        %s636 = sand.u32 %s342, 1
        %s637 = scalar_lea.sflag [#allocation12], %s636
        %s638 = sand.u32 %s342, 1
        %s639 = scalar_lea.vmem [#allocation11], %s638
        // Predicated region
        $region93: #{tpu_custom_call.1} parent=71 // pred_check
          %p640 = pneg %p355
        $region94: #{tpu_custom_call.1} parent=71 // pred_check_branch
          %642 = sbr.rel (%p640) target = $region96
        $region95: #{tpu_custom_call.1} parent=71 // pred_region
          %644 = dma.done %s637, 16
        $region96: #{tpu_custom_call.1} parent=71 // pred_fallthru
          _
        %s645 = sand.u32 %s56, 1
        %s646 = scalar_lea.sflag [#allocation4], %s645
        %s647 = sand.u32 %s56, 1
        %s648 = smul.addr %s647, 24
        %s649 = scalar_lea.vmem [#allocation3], %s648
        %p650 = pneg %p69
        %p651 = pneg %p66
        %p652 = scmp.lt.s32.totalorder %s41, 2
        %s653 = scalar_select %p652, %s41, 2
        %s654 = smul.addr %s653, 4
        %s655 = smul.addr %s654, 8
        %s656 = scalar_lea.vmem %s1, %s655
        %p657 = pneg %p95
        %p658 = pneg %p92
        %s659 = sand.u32 %s36, 1
        %s660 = scalar_lea.sflag [#allocation6], %s659
        %s661 = sand.u32 %s108, 1
        %s662 = scalar_lea.vmem [#allocation5], %s661
        %p663 = pneg %p121
        %p664 = pneg %p118
        %p665 = scmp.lt.s32.totalorder %s41, 2
        %s666 = scalar_select %p665, %s41, 2
        %s667 = smul.addr %s666, 4
        %s668 = smul.addr %s667, 8
        %s669 = scalar_lea.vmem %s3, %s668
        %p670 = pneg %p147
        %p671 = pneg %p144
        %p672 = scmp.lt.s32.totalorder %s41, 2
        %s673 = scalar_select %p672, %s41, 2
        %s674 = scalar_lea.vmem %s4, %s673
        %p675 = pneg %p173
        %p676 = pneg %p170
        %s677 = sand.u32 %s36, 1
        %s678 = scalar_lea.sflag [#allocation6], %s677
        %s679 = sand.u32 %s186, 1
        %s680 = scalar_lea.vmem [#allocation7], %s679
        %p681 = pneg %p199
        %p682 = pneg %p196
        %s683 = sand.u32 %s36, 1
        %s684 = scalar_lea.sflag [#allocation9], %s683
        %s685 = sand.u32 %s212, 1
        %s686 = scalar_lea.vmem [#allocation8], %s685
        %p687 = pneg %p225
        %p688 = pneg %p222
        %p689 = scmp.lt.s32.totalorder %s41, 2
        %s690 = scalar_select %p689, %s41, 2
        %s691 = smul.addr %s690, 4
        %s692 = smul.addr %s691, 8
        %s693 = scalar_lea.vmem %s7, %s692
        %p694 = pneg %p251
        %p695 = pneg %p248
        %p696 = scmp.lt.s32.totalorder %s41, 2
        %s697 = scalar_select %p696, %s41, 2
        %s698 = scalar_lea.vmem %s8, %s697
        %p699 = pneg %p277
        %p700 = pneg %p274
        %p701 = scmp.lt.s32.totalorder %s41, 2
        %s702 = scalar_select %p701, %s41, 2
        %s703 = smul.addr %s702, 8
        %s704 = smul.addr %s703, 8
        %s705 = scalar_lea.vmem %s9, %s704
        %p706 = pneg %p303
        %p707 = pneg %p300
        %s708 = sand.u32 %s36, 1
        %s709 = scalar_lea.sflag [#allocation9], %s708
        %s710 = sand.u32 %s316, 1
        %s711 = scalar_lea.vmem [#allocation10], %s710
        %p712 = pneg %p329
        %p713 = pneg %p326
        %s714 = sand.u32 %s342, 1
        %s715 = scalar_lea.sflag [#allocation12], %s714
        %s716 = sand.u32 %s342, 1
        %s717 = scalar_lea.vmem [#allocation11], %s716
        %p718 = pneg %p355
        %p719 = pneg %p352
        %p720 = scmp.lt.s32.totalorder %s41, 2
        %s721 = scalar_select %p720, %s41, 2
        %s722 = scalar_lea.vmem %s12, %s721
        %p723 = pneg %p381
        %p724 = pneg %p378
        %p725 = pneg %p407
        %p726 = pneg %p404
        %p727 = scmp.lt.s32.totalorder %s40, 1
        %s728 = scalar_select %p727, %s40, 1
        %s729 = smul.addr %s728, 4
        %s730 = scalar_lea.vmem %s13, %s729
        %p731 = scmp.lt.s32.totalorder %s41, 2
        %s732 = scalar_select %p731, %s41, 2
        %s733 = smul.addr %s732, 4
        %s734 = smul.addr %s733, 8
        %s735 = scalar_lea.vmem %s1, %s734
        %p736 = scmp.lt.s32.totalorder %s41, 2
        %s737 = scalar_select %p736, %s41, 2
        %s738 = smul.addr %s737, 4
        %s739 = smul.addr %s738, 8
        %s740 = scalar_lea.vmem %s3, %s739
        %p741 = scmp.lt.s32.totalorder %s41, 2
        %s742 = scalar_select %p741, %s41, 2
        %s743 = scalar_lea.vmem %s4, %s742
        %p744 = scmp.lt.s32.totalorder %s41, 2
        %s745 = scalar_select %p744, %s41, 2
        %s746 = smul.addr %s745, 4
        %s747 = smul.addr %s746, 8
        %s748 = scalar_lea.vmem %s7, %s747
        %p749 = scmp.lt.s32.totalorder %s41, 2
        %s750 = scalar_select %p749, %s41, 2
        %s751 = scalar_lea.vmem %s8, %s750
        %p752 = scmp.lt.s32.totalorder %s41, 2
        %s753 = scalar_select %p752, %s41, 2
        %s754 = smul.addr %s753, 8
        %s755 = smul.addr %s754, 8
        %s756 = scalar_lea.vmem %s9, %s755
        %p757 = scmp.lt.s32.totalorder %s41, 2
        %s758 = scalar_select %p757, %s41, 2
        %s759 = scalar_lea.vmem %s12, %s758
        %p760 = scmp.lt.s32.totalorder %s40, 1
        %s761 = scalar_select %p760, %s40, 1
        %s762 = smul.addr %s761, 4
        %s763 = scalar_lea.vmem %s13, %s762
        %p764 = scmp.eq.s32.totalorder %s41, 0
        // Predicated region
        $region97: #{tpu_custom_call.1} parent=71 // pred_check
          %p765 = pneg %p764
        $region98: #{tpu_custom_call.1} parent=71 // pred_check_branch
          %767 = sbr.rel (%p765) target = $region100
        $region99: #{tpu_custom_call.1} parent=71 // pred_region
          %v768 = vld [vmem:[%s594] sm:$0xff]
          %v769 = vld [vmem:[%s594 + $0x8] sm:$0xff]
          %v770 = vld [vmem:[%s594 + $0x10] sm:$0xff]
          %vm771 = vcmask 261120
          %772 = vst.msk [vmem:[#allocation2] sm:$0xff] %vm771, %v768
          %773 = vst.msk [vmem:[#allocation2 + $0x8] sm:$0xff] %vm771, %v769
          %774 = vst.msk [vmem:[#allocation2 + $0x10] sm:$0xff] %vm771, %v770
        $region100: #{tpu_custom_call.1} parent=71 // pred_fallthru
          _
        %v775 = vld [vmem:[#allocation2] sm:$0xff]
        %v776 = vld [vmem:[#allocation2 + $0x8] sm:$0xff]
        %v777 = vld [vmem:[#allocation2 + $0x10] sm:$0xff]
        %v778 = vld [vmem:[%s735] sm:$0xff]
        %v779 = vld [vmem:[%s735 + $0x8] sm:$0xff]
        %v780 = vld [vmem:[%s735 + $0x10] sm:$0xff]
        %v781 = vld [vmem:[%s735 + $0x18] sm:$0xff]
        %v782 = vld [vmem:[%s603] sm:$0x1]
        %v784 = vperm.slane %v782, 0
        %vm786 = vcmask 261120
        %v788 = vsel %vm786, %v775, 0
        %v791 = vsel %vm786, %v776, 0
        %v794 = vsel %vm786, %v777, 0
        %796 = vmatpush.msra.mxu0 0.0
        %797 = vmatpush.msra.mxu0 0.0
        %798 = vmatpush.msra.mxu0 0.0
        %799 = vmatpush.msra.mxu0 0.0
        %800 = vmatpush.msra.mxu0 0.0
        %801 = vmatpush.msra.mxu0 0.0
        %802 = vmatpush.msra.mxu0 0.0
        %803 = vmatpush.msra.mxu0 0.0
        %804 = vmatpush.msra.mxu0 0.0
        %805 = vmatpush.msra.mxu0 0.0
        %806 = vmatpush.msra.mxu0 0.0
        %807 = vmatpush.msra.mxu0 0.0
        %808 = vmatpush.msra.mxu0 %v781
        %809 = vmatpush.msra.mxu0 %v780
        %810 = vmatpush.msra.mxu0 %v779
        %811 = vmatpush.msra.mxu0 %v778
        %812 = vmatmul.f32.gmra.mxu0 %v788
        %v813 = vpop.f32.mrf.mxu0
        %v814 = vadd.f32 %v784, %v813
        %815 = vmatmul.f32.gmra.mxu0 %v791
        %v816 = vpop.f32.mrf.mxu0
        %v817 = vadd.f32 %v784, %v816
        %818 = vmatmul.f32.gmra.mxu0 %v794
        %v819 = vpop.f32.mrf.mxu0
        %v820 = vadd.f32 %v784, %v819
        %821 = vdwg.mxu0
        %823 = vrot.lane.b32.xlu0 %v814, 96
        %v824 = vpop.permute.xlu0 %823
        %vm825 = vcmask 64512
        %v826 = vsel %vm825, %v814, 0
        %v828 = vsel %vm825, %v824, 0
        %830 = vmatpush.xpose.msra.mxu0 0.0
        %831 = vmatpush.xpose.msra.mxu0 0.0
        %832 = vmatpush.xpose.msra.mxu0 0.0
        %833 = vmatpush.xpose.msra.mxu0 0.0
        %834 = vmatpush.xpose.msra.mxu0 0.0
        %835 = vmatpush.xpose.msra.mxu0 0.0
        %836 = vmatpush.xpose.msra.mxu0 0.0
        %837 = vmatpush.xpose.msra.mxu0 0.0
        %838 = vmatpush.xpose.msra.mxu0 0.0
        %839 = vmatpush.xpose.msra.mxu0 0.0
        %840 = vmatpush.xpose.msra.mxu0 0.0
        %841 = vmatpush.xpose.msra.mxu0 0.0
        %842 = vmatpush.xpose.msra.mxu0 0.0
        %843 = vmatpush.xpose.msra.mxu0 0.0
        %844 = vmatpush.xpose.msra.mxu0 0.0
        %845 = vmatpush.xpose.msra.mxu0 %v828
        %846 = vmatmul.f32.gmra.mxu0 %v826
        %v847 = vpop.f32.mrf.mxu0
        %v848 = vadd.f32 0.0, %v847
        %849 = vdwg.mxu0
        %851 = vrot.lane.b32.xlu0 %v817, 96
        %v852 = vpop.permute.xlu0 %851
        %v853 = vsel %vm825, %v817, 0
        %v855 = vsel %vm825, %v852, 0
        %857 = vmatpush.xpose.msra.mxu0 0.0
        %858 = vmatpush.xpose.msra.mxu0 0.0
        %859 = vmatpush.xpose.msra.mxu0 0.0
        %860 = vmatpush.xpose.msra.mxu0 0.0
        %861 = vmatpush.xpose.msra.mxu0 0.0
        %862 = vmatpush.xpose.msra.mxu0 0.0
        %863 = vmatpush.xpose.msra.mxu0 0.0
        %864 = vmatpush.xpose.msra.mxu0 0.0
        %865 = vmatpush.xpose.msra.mxu0 0.0
        %866 = vmatpush.xpose.msra.mxu0 0.0
        %867 = vmatpush.xpose.msra.mxu0 0.0
        %868 = vmatpush.xpose.msra.mxu0 0.0
        %869 = vmatpush.xpose.msra.mxu0 0.0
        %870 = vmatpush.xpose.msra.mxu0 0.0
        %871 = vmatpush.xpose.msra.mxu0 0.0
        %872 = vmatpush.xpose.msra.mxu0 %v855
        %873 = vmatmul.f32.gmra.mxu0 %v853
        %v874 = vpop.f32.mrf.mxu0
        %v875 = vadd.f32 0.0, %v874
        %876 = vdwg.mxu0
        %878 = vrot.lane.b32.xlu0 %v820, 96
        %v879 = vpop.permute.xlu0 %878
        %v880 = vsel %vm825, %v820, 0
        %v882 = vsel %vm825, %v879, 0
        %884 = vmatpush.xpose.msra.mxu0 0.0
        %885 = vmatpush.xpose.msra.mxu0 0.0
        %886 = vmatpush.xpose.msra.mxu0 0.0
        %887 = vmatpush.xpose.msra.mxu0 0.0
        %888 = vmatpush.xpose.msra.mxu0 0.0
        %889 = vmatpush.xpose.msra.mxu0 0.0
        %890 = vmatpush.xpose.msra.mxu0 0.0
        %891 = vmatpush.xpose.msra.mxu0 0.0
        %892 = vmatpush.xpose.msra.mxu0 0.0
        %893 = vmatpush.xpose.msra.mxu0 0.0
        %894 = vmatpush.xpose.msra.mxu0 0.0
        %895 = vmatpush.xpose.msra.mxu0 0.0
        %896 = vmatpush.xpose.msra.mxu0 0.0
        %897 = vmatpush.xpose.msra.mxu0 0.0
        %898 = vmatpush.xpose.msra.mxu0 0.0
        %899 = vmatpush.xpose.msra.mxu0 %v882
        %900 = vmatmul.f32.gmra.mxu0 %v880
        %v901 = vpop.f32.mrf.mxu0
        %v902 = vadd.f32 0.0, %v901
        %903 = vdwg.mxu0
        %v904 = vmul.f32 %v848, 0.35355338
        %v905 = vmul.f32 %v875, 0.35355338
        %v906 = vmul.f32 %v902, 0.35355338
        %v907 = vsel %vm825, %v904, -inf
        %908 = vmax.xlane.f32.xlu0 %v907
        %v909 = vpop.xlane.xlu0 %908
        %v910 = vsel %vm825, %v905, -inf
        %911 = vmax.xlane.f32.xlu0 %v910
        %v912 = vpop.xlane.xlu0 %911
        %v913 = vsel %vm825, %v906, -inf
        %914 = vmax.xlane.f32.xlu0 %v913
        %v915 = vpop.xlane.xlu0 %914
        %v916 = vsub.f32 %v904, %v909
        %v917 = vsub.f32 %v905, %v912
        %v918 = vsub.f32 %v906, %v915
        %v919 = vmul.f32 %v916, 1.442695
        %v920 = vpow.pop %v919
        %v921 = vmul.f32 %v917, 1.442695
        %v922 = vpow.pop %v921
        %v923 = vmul.f32 %v918, 1.442695
        %v924 = vpow.pop %v923
        %v925 = vsel %vm825, %v920, 0.0
        %926 = vadd.xlane.f32.xlu0 %v925
        %v927 = vpop.xlane.xlu0 %926
        %v928 = vsel %vm825, %v922, 0.0
        %929 = vadd.xlane.f32.xlu0 %v928
        %v930 = vpop.xlane.xlu0 %929
        %v931 = vsel %vm825, %v924, 0.0
        %932 = vadd.xlane.f32.xlu0 %v931
        %v933 = vpop.xlane.xlu0 %932
        %v934 = vrcp.pop %v927
        %v935 = vmul.f32 %v927, %v934
        %v936 = vsub.f32 1.0, %v935
        %v937 = vmul.f32 %v934, %v936
        %v938 = vadd.f32 %v934, %v937
        %vm939 = vweird.f32 %v927
        %vm940 = vweird.f32 %v934
        %vm941 = vmor %vm939, %vm940
        %v942 = vsel %vm941, %v934, %v938
        %v943 = vand.u32 2147483647, %v927
        %vm944 = vcmp.eq.f32.partialorder %v943, 8.507059e+37
        %v945 = vand.u32 %v927, 2147483648
        %v946 = vor.u32 1.1754944e-38, %v945
        %v947 = vsel %vm944, %v946, %v942
        %v948 = vrcp.pop %v930
        %v949 = vmul.f32 %v930, %v948
        %v950 = vsub.f32 1.0, %v949
        %v951 = vmul.f32 %v948, %v950
        %v952 = vadd.f32 %v948, %v951
        %vm953 = vweird.f32 %v930
        %vm954 = vweird.f32 %v948
        %vm955 = vmor %vm953, %vm954
        %v956 = vsel %vm955, %v948, %v952
        %v957 = vand.u32 2147483647, %v930
        %vm958 = vcmp.eq.f32.partialorder %v957, 8.507059e+37
        %v959 = vand.u32 %v930, 2147483648
        %v960 = vor.u32 1.1754944e-38, %v959
        %v961 = vsel %vm958, %v960, %v956
        %v962 = vrcp.pop %v933
        %v963 = vmul.f32 %v933, %v962
        %v964 = vsub.f32 1.0, %v963
        %v965 = vmul.f32 %v962, %v964
        %v966 = vadd.f32 %v962, %v965
        %vm967 = vweird.f32 %v933
        %vm968 = vweird.f32 %v962
        %vm969 = vmor %vm967, %vm968
        %v970 = vsel %vm969, %v962, %v966
        %v971 = vand.u32 2147483647, %v933
        %vm972 = vcmp.eq.f32.partialorder %v971, 8.507059e+37
        %v973 = vand.u32 %v933, 2147483648
        %v974 = vor.u32 1.1754944e-38, %v973
        %v975 = vsel %vm972, %v974, %v970
        %v976 = vmul.f32 %v920, %v947
        %v977 = vmul.f32 %v922, %v961
        %v978 = vmul.f32 %v924, %v975
        %979 = vrot.lane.b32.xlu0 %v814, 64
        %v980 = vpop.permute.xlu0 %979
        %v983 = vsel %vm825, %v976, 0
        %985 = vmatpush.msra.mxu0 0.0
        %986 = vmatpush.msra.mxu0 0.0
        %987 = vmatpush.msra.mxu0 0.0
        %988 = vmatpush.msra.mxu0 0.0
        %989 = vmatpush.msra.mxu0 0.0
        %990 = vmatpush.msra.mxu0 0.0
        %991 = vmatpush.msra.mxu0 0.0
        %992 = vmatpush.msra.mxu0 0.0
        %993 = vmatpush.msra.mxu0 0.0
        %994 = vmatpush.msra.mxu0 0.0
        %995 = vmatpush.msra.mxu0 0.0
        %996 = vmatpush.msra.mxu0 0.0
        %997 = vmatpush.msra.mxu0 0.0
        %998 = vmatpush.msra.mxu0 0.0
        %999 = vmatpush.msra.mxu0 0.0
        %1000 = vmatpush.msra.mxu0 %v980
        %1001 = vmatmul.f32.gmra.mxu0 %v983
        %v1002 = vpop.f32.mrf.mxu0
        %v1003 = vadd.f32 0.0, %v1002
        %1004 = vdwg.mxu0
        %1005 = vrot.lane.b32.xlu0 %v817, 64
        %v1006 = vpop.permute.xlu0 %1005
        %v1009 = vsel %vm825, %v977, 0
        %1011 = vmatpush.msra.mxu0 0.0
        %1012 = vmatpush.msra.mxu0 0.0
        %1013 = vmatpush.msra.mxu0 0.0
        %1014 = vmatpush.msra.mxu0 0.0
        %1015 = vmatpush.msra.mxu0 0.0
        %1016 = vmatpush.msra.mxu0 0.0
        %1017 = vmatpush.msra.mxu0 0.0
        %1018 = vmatpush.msra.mxu0 0.0
        %1019 = vmatpush.msra.mxu0 0.0
        %1020 = vmatpush.msra.mxu0 0.0
        %1021 = vmatpush.msra.mxu0 0.0
        %1022 = vmatpush.msra.mxu0 0.0
        %1023 = vmatpush.msra.mxu0 0.0
        %1024 = vmatpush.msra.mxu0 0.0
        %1025 = vmatpush.msra.mxu0 0.0
        %1026 = vmatpush.msra.mxu0 %v1006
        %1027 = vmatmul.f32.gmra.mxu0 %v1009
        %v1028 = vpop.f32.mrf.mxu0
        %v1029 = vadd.f32 0.0, %v1028
        %1030 = vdwg.mxu0
        %1031 = vrot.lane.b32.xlu0 %v820, 64
        %v1032 = vpop.permute.xlu0 %1031
        %v1035 = vsel %vm825, %v978, 0
        %1037 = vmatpush.msra.mxu0 0.0
        %1038 = vmatpush.msra.mxu0 0.0
        %1039 = vmatpush.msra.mxu0 0.0
        %1040 = vmatpush.msra.mxu0 0.0
        %1041 = vmatpush.msra.mxu0 0.0
        %1042 = vmatpush.msra.mxu0 0.0
        %1043 = vmatpush.msra.mxu0 0.0
        %1044 = vmatpush.msra.mxu0 0.0
        %1045 = vmatpush.msra.mxu0 0.0
        %1046 = vmatpush.msra.mxu0 0.0
        %1047 = vmatpush.msra.mxu0 0.0
        %1048 = vmatpush.msra.mxu0 0.0
        %1049 = vmatpush.msra.mxu0 0.0
        %1050 = vmatpush.msra.mxu0 0.0
        %1051 = vmatpush.msra.mxu0 0.0
        %1052 = vmatpush.msra.mxu0 %v1032
        %1053 = vmatmul.f32.gmra.mxu0 %v1035
        %v1054 = vpop.f32.mrf.mxu0
        %v1055 = vadd.f32 0.0, %v1054
        %1056 = vdwg.mxu0
        %1057 = vrot.lane.b32.xlu0 %v814, 120
        %v1058 = vpop.permute.xlu0 %1057
        %1059 = vrot.lane.b32.xlu0 %v814, 88
        %v1060 = vpop.permute.xlu0 %1059
        %v1061 = vsel %vm825, %v1058, 0
        %v1063 = vsel %vm825, %v1060, 0
        %1065 = vmatpush.xpose.msra.mxu0 0.0
        %1066 = vmatpush.xpose.msra.mxu0 0.0
        %1067 = vmatpush.xpose.msra.mxu0 0.0
        %1068 = vmatpush.xpose.msra.mxu0 0.0
        %1069 = vmatpush.xpose.msra.mxu0 0.0
        %1070 = vmatpush.xpose.msra.mxu0 0.0
        %1071 = vmatpush.xpose.msra.mxu0 0.0
        %1072 = vmatpush.xpose.msra.mxu0 0.0
        %1073 = vmatpush.xpose.msra.mxu0 0.0
        %1074 = vmatpush.xpose.msra.mxu0 0.0
        %1075 = vmatpush.xpose.msra.mxu0 0.0
        %1076 = vmatpush.xpose.msra.mxu0 0.0
        %1077 = vmatpush.xpose.msra.mxu0 0.0
        %1078 = vmatpush.xpose.msra.mxu0 0.0
        %1079 = vmatpush.xpose.msra.mxu0 0.0
        %1080 = vmatpush.xpose.msra.mxu0 %v1063
        %1081 = vmatmul.f32.gmra.mxu0 %v1061
        %v1082 = vpop.f32.mrf.mxu0
        %v1083 = vadd.f32 0.0, %v1082
        %1084 = vdwg.mxu0
        %1085 = vrot.lane.b32.xlu0 %v817, 120
        %v1086 = vpop.permute.xlu0 %1085
        %1087 = vrot.lane.b32.xlu0 %v817, 88
        %v1088 = vpop.permute.xlu0 %1087
        %v1089 = vsel %vm825, %v1086, 0
        %v1091 = vsel %vm825, %v1088, 0
        %1093 = vmatpush.xpose.msra.mxu0 0.0
        %1094 = vmatpush.xpose.msra.mxu0 0.0
        %1095 = vmatpush.xpose.msra.mxu0 0.0
        %1096 = vmatpush.xpose.msra.mxu0 0.0
        %1097 = vmatpush.xpose.msra.mxu0 0.0
        %1098 = vmatpush.xpose.msra.mxu0 0.0
        %1099 = vmatpush.xpose.msra.mxu0 0.0
        %1100 = vmatpush.xpose.msra.mxu0 0.0
        %1101 = vmatpush.xpose.msra.mxu0 0.0
        %1102 = vmatpush.xpose.msra.mxu0 0.0
        %1103 = vmatpush.xpose.msra.mxu0 0.0
        %1104 = vmatpush.xpose.msra.mxu0 0.0
        %1105 = vmatpush.xpose.msra.mxu0 0.0
        %1106 = vmatpush.xpose.msra.mxu0 0.0
        %1107 = vmatpush.xpose.msra.mxu0 0.0
        %1108 = vmatpush.xpose.msra.mxu0 %v1091
        %1109 = vmatmul.f32.gmra.mxu0 %v1089
        %v1110 = vpop.f32.mrf.mxu0
        %v1111 = vadd.f32 0.0, %v1110
        %1112 = vdwg.mxu0
        %1113 = vrot.lane.b32.xlu0 %v820, 120
        %v1114 = vpop.permute.xlu0 %1113
        %1115 = vrot.lane.b32.xlu0 %v820, 88
        %v1116 = vpop.permute.xlu0 %1115
        %v1117 = vsel %vm825, %v1114, 0
        %v1119 = vsel %vm825, %v1116, 0
        %1121 = vmatpush.xpose.msra.mxu0 0.0
        %1122 = vmatpush.xpose.msra.mxu0 0.0
        %1123 = vmatpush.xpose.msra.mxu0 0.0
        %1124 = vmatpush.xpose.msra.mxu0 0.0
        %1125 = vmatpush.xpose.msra.mxu0 0.0
        %1126 = vmatpush.xpose.msra.mxu0 0.0
        %1127 = vmatpush.xpose.msra.mxu0 0.0
        %1128 = vmatpush.xpose.msra.mxu0 0.0
        %1129 = vmatpush.xpose.msra.mxu0 0.0
        %1130 = vmatpush.xpose.msra.mxu0 0.0
        %1131 = vmatpush.xpose.msra.mxu0 0.0
        %1132 = vmatpush.xpose.msra.mxu0 0.0
        %1133 = vmatpush.xpose.msra.mxu0 0.0
        %1134 = vmatpush.xpose.msra.mxu0 0.0
        %1135 = vmatpush.xpose.msra.mxu0 0.0
        %1136 = vmatpush.xpose.msra.mxu0 %v1119
        %1137 = vmatmul.f32.gmra.mxu0 %v1117
        %v1138 = vpop.f32.mrf.mxu0
        %v1139 = vadd.f32 0.0, %v1138
        %1140 = vdwg.mxu0
        %v1141 = vmul.f32 %v1083, 0.35355338
        %v1142 = vmul.f32 %v1111, 0.35355338
        %v1143 = vmul.f32 %v1139, 0.35355338
        %v1144 = vsel %vm825, %v1141, -inf
        %1145 = vmax.xlane.f32.xlu0 %v1144
        %v1146 = vpop.xlane.xlu0 %1145
        %v1147 = vsel %vm825, %v1142, -inf
        %1148 = vmax.xlane.f32.xlu0 %v1147
        %v1149 = vpop.xlane.xlu0 %1148
        %v1150 = vsel %vm825, %v1143, -inf
        %1151 = vmax.xlane.f32.xlu0 %v1150
        %v1152 = vpop.xlane.xlu0 %1151
        %v1153 = vsub.f32 %v1141, %v1146
        %v1154 = vsub.f32 %v1142, %v1149
        %v1155 = vsub.f32 %v1143, %v1152
        %v1156 = vmul.f32 %v1153, 1.442695
        %v1157 = vpow.pop %v1156
        %v1158 = vmul.f32 %v1154, 1.442695
        %v1159 = vpow.pop %v1158
        %v1160 = vmul.f32 %v1155, 1.442695
        %v1161 = vpow.pop %v1160
        %v1162 = vsel %vm825, %v1157, 0.0
        %1163 = vadd.xlane.f32.xlu0 %v1162
        %v1164 = vpop.xlane.xlu0 %1163
        %v1165 = vsel %vm825, %v1159, 0.0
        %1166 = vadd.xlane.f32.xlu0 %v1165
        %v1167 = vpop.xlane.xlu0 %1166
        %v1168 = vsel %vm825, %v1161, 0.0
        %1169 = vadd.xlane.f32.xlu0 %v1168
        %v1170 = vpop.xlane.xlu0 %1169
        %v1171 = vrcp.pop %v1164
        %v1172 = vmul.f32 %v1164, %v1171
        %v1173 = vsub.f32 1.0, %v1172
        %v1174 = vmul.f32 %v1171, %v1173
        %v1175 = vadd.f32 %v1171, %v1174
        %vm1176 = vweird.f32 %v1164
        %vm1177 = vweird.f32 %v1171
        %vm1178 = vmor %vm1176, %vm1177
        %v1179 = vsel %vm1178, %v1171, %v1175
        %v1180 = vand.u32 2147483647, %v1164
        %vm1181 = vcmp.eq.f32.partialorder %v1180, 8.507059e+37
        %v1182 = vand.u32 %v1164, 2147483648
        %v1183 = vor.u32 1.1754944e-38, %v1182
        %v1184 = vsel %vm1181, %v1183, %v1179
        %v1185 = vrcp.pop %v1167
        %v1186 = vmul.f32 %v1167, %v1185
        %v1187 = vsub.f32 1.0, %v1186
        %v1188 = vmul.f32 %v1185, %v1187
        %v1189 = vadd.f32 %v1185, %v1188
        %vm1190 = vweird.f32 %v1167
        %vm1191 = vweird.f32 %v1185
        %vm1192 = vmor %vm1190, %vm1191
        %v1193 = vsel %vm1192, %v1185, %v1189
        %v1194 = vand.u32 2147483647, %v1167
        %vm1195 = vcmp.eq.f32.partialorder %v1194, 8.507059e+37
        %v1196 = vand.u32 %v1167, 2147483648
        %v1197 = vor.u32 1.1754944e-38, %v1196
        %v1198 = vsel %vm1195, %v1197, %v1193
        %v1199 = vrcp.pop %v1170
        %v1200 = vmul.f32 %v1170, %v1199
        %v1201 = vsub.f32 1.0, %v1200
        %v1202 = vmul.f32 %v1199, %v1201
        %v1203 = vadd.f32 %v1199, %v1202
        %vm1204 = vweird.f32 %v1170
        %vm1205 = vweird.f32 %v1199
        %vm1206 = vmor %vm1204, %vm1205
        %v1207 = vsel %vm1206, %v1199, %v1203
        %v1208 = vand.u32 2147483647, %v1170
        %vm1209 = vcmp.eq.f32.partialorder %v1208, 8.507059e+37
        %v1210 = vand.u32 %v1170, 2147483648
        %v1211 = vor.u32 1.1754944e-38, %v1210
        %v1212 = vsel %vm1209, %v1211, %v1207
        %v1213 = vmul.f32 %v1157, %v1184
        %v1214 = vmul.f32 %v1159, %v1198
        %v1215 = vmul.f32 %v1161, %v1212
        %1216 = vrot.lane.b32.xlu0 %v814, 56
        %v1217 = vpop.permute.xlu0 %1216
        %v1220 = vsel %vm825, %v1213, 0
        %1222 = vmatpush.msra.mxu0 0.0
        %1223 = vmatpush.msra.mxu0 0.0
        %1224 = vmatpush.msra.mxu0 0.0
        %1225 = vmatpush.msra.mxu0 0.0
        %1226 = vmatpush.msra.mxu0 0.0
        %1227 = vmatpush.msra.mxu0 0.0
        %1228 = vmatpush.msra.mxu0 0.0
        %1229 = vmatpush.msra.mxu0 0.0
        %1230 = vmatpush.msra.mxu0 0.0
        %1231 = vmatpush.msra.mxu0 0.0
        %1232 = vmatpush.msra.mxu0 0.0
        %1233 = vmatpush.msra.mxu0 0.0
        %1234 = vmatpush.msra.mxu0 0.0
        %1235 = vmatpush.msra.mxu0 0.0
        %1236 = vmatpush.msra.mxu0 0.0
        %1237 = vmatpush.msra.mxu0 %v1217
        %1238 = vmatmul.f32.gmra.mxu0 %v1220
        %v1239 = vpop.f32.mrf.mxu0
        %v1240 = vadd.f32 0.0, %v1239
        %1241 = vdwg.mxu0
        %1242 = vrot.lane.b32.xlu0 %v817, 56
        %v1243 = vpop.permute.xlu0 %1242
        %v1246 = vsel %vm825, %v1214, 0
        %1248 = vmatpush.msra.mxu0 0.0
        %1249 = vmatpush.msra.mxu0 0.0
        %1250 = vmatpush.msra.mxu0 0.0
        %1251 = vmatpush.msra.mxu0 0.0
        %1252 = vmatpush.msra.mxu0 0.0
        %1253 = vmatpush.msra.mxu0 0.0
        %1254 = vmatpush.msra.mxu0 0.0
        %1255 = vmatpush.msra.mxu0 0.0
        %1256 = vmatpush.msra.mxu0 0.0
        %1257 = vmatpush.msra.mxu0 0.0
        %1258 = vmatpush.msra.mxu0 0.0
        %1259 = vmatpush.msra.mxu0 0.0
        %1260 = vmatpush.msra.mxu0 0.0
        %1261 = vmatpush.msra.mxu0 0.0
        %1262 = vmatpush.msra.mxu0 0.0
        %1263 = vmatpush.msra.mxu0 %v1243
        %1264 = vmatmul.f32.gmra.mxu0 %v1246
        %v1265 = vpop.f32.mrf.mxu0
        %v1266 = vadd.f32 0.0, %v1265
        %1267 = vdwg.mxu0
        %1268 = vrot.lane.b32.xlu0 %v820, 56
        %v1269 = vpop.permute.xlu0 %1268
        %v1272 = vsel %vm825, %v1215, 0
        %1274 = vmatpush.msra.mxu0 0.0
        %1275 = vmatpush.msra.mxu0 0.0
        %1276 = vmatpush.msra.mxu0 0.0
        %1277 = vmatpush.msra.mxu0 0.0
        %1278 = vmatpush.msra.mxu0 0.0
        %1279 = vmatpush.msra.mxu0 0.0
        %1280 = vmatpush.msra.mxu0 0.0
        %1281 = vmatpush.msra.mxu0 0.0
        %1282 = vmatpush.msra.mxu0 0.0
        %1283 = vmatpush.msra.mxu0 0.0
        %1284 = vmatpush.msra.mxu0 0.0
        %1285 = vmatpush.msra.mxu0 0.0
        %1286 = vmatpush.msra.mxu0 0.0
        %1287 = vmatpush.msra.mxu0 0.0
        %1288 = vmatpush.msra.mxu0 0.0
        %1289 = vmatpush.msra.mxu0 %v1269
        %1290 = vmatmul.f32.gmra.mxu0 %v1272
        %v1291 = vpop.f32.mrf.mxu0
        %v1292 = vadd.f32 0.0, %v1291
        %1293 = vdwg.mxu0
        %1294 = vrot.lane.b32.xlu0 %v814, 112
        %v1295 = vpop.permute.xlu0 %1294
        %1296 = vrot.lane.b32.xlu0 %v814, 80
        %v1297 = vpop.permute.xlu0 %1296
        %v1298 = vsel %vm825, %v1295, 0
        %v1300 = vsel %vm825, %v1297, 0
        %1302 = vmatpush.xpose.msra.mxu0 0.0
        %1303 = vmatpush.xpose.msra.mxu0 0.0
        %1304 = vmatpush.xpose.msra.mxu0 0.0
        %1305 = vmatpush.xpose.msra.mxu0 0.0
        %1306 = vmatpush.xpose.msra.mxu0 0.0
        %1307 = vmatpush.xpose.msra.mxu0 0.0
        %1308 = vmatpush.xpose.msra.mxu0 0.0
        %1309 = vmatpush.xpose.msra.mxu0 0.0
        %1310 = vmatpush.xpose.msra.mxu0 0.0
        %1311 = vmatpush.xpose.msra.mxu0 0.0
        %1312 = vmatpush.xpose.msra.mxu0 0.0
        %1313 = vmatpush.xpose.msra.mxu0 0.0
        %1314 = vmatpush.xpose.msra.mxu0 0.0
        %1315 = vmatpush.xpose.msra.mxu0 0.0
        %1316 = vmatpush.xpose.msra.mxu0 0.0
        %1317 = vmatpush.xpose.msra.mxu0 %v1300
        %1318 = vmatmul.f32.gmra.mxu0 %v1298
        %v1319 = vpop.f32.mrf.mxu0
        %v1320 = vadd.f32 0.0, %v1319
        %1321 = vdwg.mxu0
        %1322 = vrot.lane.b32.xlu0 %v817, 112
        %v1323 = vpop.permute.xlu0 %1322
        %1324 = vrot.lane.b32.xlu0 %v817, 80
        %v1325 = vpop.permute.xlu0 %1324
        %v1326 = vsel %vm825, %v1323, 0
        %v1328 = vsel %vm825, %v1325, 0
        %1330 = vmatpush.xpose.msra.mxu0 0.0
        %1331 = vmatpush.xpose.msra.mxu0 0.0
        %1332 = vmatpush.xpose.msra.mxu0 0.0
        %1333 = vmatpush.xpose.msra.mxu0 0.0
        %1334 = vmatpush.xpose.msra.mxu0 0.0
        %1335 = vmatpush.xpose.msra.mxu0 0.0
        %1336 = vmatpush.xpose.msra.mxu0 0.0
        %1337 = vmatpush.xpose.msra.mxu0 0.0
        %1338 = vmatpush.xpose.msra.mxu0 0.0
        %1339 = vmatpush.xpose.msra.mxu0 0.0
        %1340 = vmatpush.xpose.msra.mxu0 0.0
        %1341 = vmatpush.xpose.msra.mxu0 0.0
        %1342 = vmatpush.xpose.msra.mxu0 0.0
        %1343 = vmatpush.xpose.msra.mxu0 0.0
        %1344 = vmatpush.xpose.msra.mxu0 0.0
        %1345 = vmatpush.xpose.msra.mxu0 %v1328
        %1346 = vmatmul.f32.gmra.mxu0 %v1326
        %v1347 = vpop.f32.mrf.mxu0
        %v1348 = vadd.f32 0.0, %v1347
        %1349 = vdwg.mxu0
        %1350 = vrot.lane.b32.xlu0 %v820, 112
        %v1351 = vpop.permute.xlu0 %1350
        %1352 = vrot.lane.b32.xlu0 %v820, 80
        %v1353 = vpop.permute.xlu0 %1352
        %v1354 = vsel %vm825, %v1351, 0
        %v1356 = vsel %vm825, %v1353, 0
        %1358 = vmatpush.xpose.msra.mxu0 0.0
        %1359 = vmatpush.xpose.msra.mxu0 0.0
        %1360 = vmatpush.xpose.msra.mxu0 0.0
        %1361 = vmatpush.xpose.msra.mxu0 0.0
        %1362 = vmatpush.xpose.msra.mxu0 0.0
        %1363 = vmatpush.xpose.msra.mxu0 0.0
        %1364 = vmatpush.xpose.msra.mxu0 0.0
        %1365 = vmatpush.xpose.msra.mxu0 0.0
        %1366 = vmatpush.xpose.msra.mxu0 0.0
        %1367 = vmatpush.xpose.msra.mxu0 0.0
        %1368 = vmatpush.xpose.msra.mxu0 0.0
        %1369 = vmatpush.xpose.msra.mxu0 0.0
        %1370 = vmatpush.xpose.msra.mxu0 0.0
        %1371 = vmatpush.xpose.msra.mxu0 0.0
        %1372 = vmatpush.xpose.msra.mxu0 0.0
        %1373 = vmatpush.xpose.msra.mxu0 %v1356
        %1374 = vmatmul.f32.gmra.mxu0 %v1354
        %v1375 = vpop.f32.mrf.mxu0
        %v1376 = vadd.f32 0.0, %v1375
        %1377 = vdwg.mxu0
        %v1378 = vmul.f32 %v1320, 0.35355338
        %v1379 = vmul.f32 %v1348, 0.35355338
        %v1380 = vmul.f32 %v1376, 0.35355338
        %v1381 = vsel %vm825, %v1378, -inf
        %1382 = vmax.xlane.f32.xlu0 %v1381
        %v1383 = vpop.xlane.xlu0 %1382
        %v1384 = vsel %vm825, %v1379, -inf
        %1385 = vmax.xlane.f32.xlu0 %v1384
        %v1386 = vpop.xlane.xlu0 %1385
        %v1387 = vsel %vm825, %v1380, -inf
        %1388 = vmax.xlane.f32.xlu0 %v1387
        %v1389 = vpop.xlane.xlu0 %1388
        %v1390 = vsub.f32 %v1378, %v1383
        %v1391 = vsub.f32 %v1379, %v1386
        %v1392 = vsub.f32 %v1380, %v1389
        %v1393 = vmul.f32 %v1390, 1.442695
        %v1394 = vpow.pop %v1393
        %v1395 = vmul.f32 %v1391, 1.442695
        %v1396 = vpow.pop %v1395
        %v1397 = vmul.f32 %v1392, 1.442695
        %v1398 = vpow.pop %v1397
        %v1399 = vsel %vm825, %v1394, 0.0
        %1400 = vadd.xlane.f32.xlu0 %v1399
        %v1401 = vpop.xlane.xlu0 %1400
        %v1402 = vsel %vm825, %v1396, 0.0
        %1403 = vadd.xlane.f32.xlu0 %v1402
        %v1404 = vpop.xlane.xlu0 %1403
        %v1405 = vsel %vm825, %v1398, 0.0
        %1406 = vadd.xlane.f32.xlu0 %v1405
        %v1407 = vpop.xlane.xlu0 %1406
        %v1408 = vrcp.pop %v1401
        %v1409 = vmul.f32 %v1401, %v1408
        %v1410 = vsub.f32 1.0, %v1409
        %v1411 = vmul.f32 %v1408, %v1410
        %v1412 = vadd.f32 %v1408, %v1411
        %vm1413 = vweird.f32 %v1401
        %vm1414 = vweird.f32 %v1408
        %vm1415 = vmor %vm1413, %vm1414
        %v1416 = vsel %vm1415, %v1408, %v1412
        %v1417 = vand.u32 2147483647, %v1401
        %vm1418 = vcmp.eq.f32.partialorder %v1417, 8.507059e+37
        %v1419 = vand.u32 %v1401, 2147483648
        %v1420 = vor.u32 1.1754944e-38, %v1419
        %v1421 = vsel %vm1418, %v1420, %v1416
        %v1422 = vrcp.pop %v1404
        %v1423 = vmul.f32 %v1404, %v1422
        %v1424 = vsub.f32 1.0, %v1423
        %v1425 = vmul.f32 %v1422, %v1424
        %v1426 = vadd.f32 %v1422, %v1425
        %vm1427 = vweird.f32 %v1404
        %vm1428 = vweird.f32 %v1422
        %vm1429 = vmor %vm1427, %vm1428
        %v1430 = vsel %vm1429, %v1422, %v1426
        %v1431 = vand.u32 2147483647, %v1404
        %vm1432 = vcmp.eq.f32.partialorder %v1431, 8.507059e+37
        %v1433 = vand.u32 %v1404, 2147483648
        %v1434 = vor.u32 1.1754944e-38, %v1433
        %v1435 = vsel %vm1432, %v1434, %v1430
        %v1436 = vrcp.pop %v1407
        %v1437 = vmul.f32 %v1407, %v1436
        %v1438 = vsub.f32 1.0, %v1437
        %v1439 = vmul.f32 %v1436, %v1438
        %v1440 = vadd.f32 %v1436, %v1439
        %vm1441 = vweird.f32 %v1407
        %vm1442 = vweird.f32 %v1436
        %vm1443 = vmor %vm1441, %vm1442
        %v1444 = vsel %vm1443, %v1436, %v1440
        %v1445 = vand.u32 2147483647, %v1407
        %vm1446 = vcmp.eq.f32.partialorder %v1445, 8.507059e+37
        %v1447 = vand.u32 %v1407, 2147483648
        %v1448 = vor.u32 1.1754944e-38, %v1447
        %v1449 = vsel %vm1446, %v1448, %v1444
        %v1450 = vmul.f32 %v1394, %v1421
        %v1451 = vmul.f32 %v1396, %v1435
        %v1452 = vmul.f32 %v1398, %v1449
        %1453 = vrot.lane.b32.xlu0 %v814, 48
        %v1454 = vpop.permute.xlu0 %1453
        %v1457 = vsel %vm825, %v1450, 0
        %1459 = vmatpush.msra.mxu0 0.0
        %1460 = vmatpush.msra.mxu0 0.0
        %1461 = vmatpush.msra.mxu0 0.0
        %1462 = vmatpush.msra.mxu0 0.0
        %1463 = vmatpush.msra.mxu0 0.0
        %1464 = vmatpush.msra.mxu0 0.0
        %1465 = vmatpush.msra.mxu0 0.0
        %1466 = vmatpush.msra.mxu0 0.0
        %1467 = vmatpush.msra.mxu0 0.0
        %1468 = vmatpush.msra.mxu0 0.0
        %1469 = vmatpush.msra.mxu0 0.0
        %1470 = vmatpush.msra.mxu0 0.0
        %1471 = vmatpush.msra.mxu0 0.0
        %1472 = vmatpush.msra.mxu0 0.0
        %1473 = vmatpush.msra.mxu0 0.0
        %1474 = vmatpush.msra.mxu0 %v1454
        %1475 = vmatmul.f32.gmra.mxu0 %v1457
        %v1476 = vpop.f32.mrf.mxu0
        %v1477 = vadd.f32 0.0, %v1476
        %1478 = vdwg.mxu0
        %1479 = vrot.lane.b32.xlu0 %v817, 48
        %v1480 = vpop.permute.xlu0 %1479
        %v1483 = vsel %vm825, %v1451, 0
        %1485 = vmatpush.msra.mxu0 0.0
        %1486 = vmatpush.msra.mxu0 0.0
        %1487 = vmatpush.msra.mxu0 0.0
        %1488 = vmatpush.msra.mxu0 0.0
        %1489 = vmatpush.msra.mxu0 0.0
        %1490 = vmatpush.msra.mxu0 0.0
        %1491 = vmatpush.msra.mxu0 0.0
        %1492 = vmatpush.msra.mxu0 0.0
        %1493 = vmatpush.msra.mxu0 0.0
        %1494 = vmatpush.msra.mxu0 0.0
        %1495 = vmatpush.msra.mxu0 0.0
        %1496 = vmatpush.msra.mxu0 0.0
        %1497 = vmatpush.msra.mxu0 0.0
        %1498 = vmatpush.msra.mxu0 0.0
        %1499 = vmatpush.msra.mxu0 0.0
        %1500 = vmatpush.msra.mxu0 %v1480
        %1501 = vmatmul.f32.gmra.mxu0 %v1483
        %v1502 = vpop.f32.mrf.mxu0
        %v1503 = vadd.f32 0.0, %v1502
        %1504 = vdwg.mxu0
        %1505 = vrot.lane.b32.xlu0 %v820, 48
        %v1506 = vpop.permute.xlu0 %1505
        %v1509 = vsel %vm825, %v1452, 0
        %1511 = vmatpush.msra.mxu0 0.0
        %1512 = vmatpush.msra.mxu0 0.0
        %1513 = vmatpush.msra.mxu0 0.0
        %1514 = vmatpush.msra.mxu0 0.0
        %1515 = vmatpush.msra.mxu0 0.0
        %1516 = vmatpush.msra.mxu0 0.0
        %1517 = vmatpush.msra.mxu0 0.0
        %1518 = vmatpush.msra.mxu0 0.0
        %1519 = vmatpush.msra.mxu0 0.0
        %1520 = vmatpush.msra.mxu0 0.0
        %1521 = vmatpush.msra.mxu0 0.0
        %1522 = vmatpush.msra.mxu0 0.0
        %1523 = vmatpush.msra.mxu0 0.0
        %1524 = vmatpush.msra.mxu0 0.0
        %1525 = vmatpush.msra.mxu0 0.0
        %1526 = vmatpush.msra.mxu0 %v1506
        %1527 = vmatmul.f32.gmra.mxu0 %v1509
        %v1528 = vpop.f32.mrf.mxu0
        %v1529 = vadd.f32 0.0, %v1528
        %1530 = vdwg.mxu0
        %1531 = vrot.lane.b32.xlu0 %v814, 104
        %v1532 = vpop.permute.xlu0 %1531
        %1533 = vrot.lane.b32.xlu0 %v814, 72
        %v1534 = vpop.permute.xlu0 %1533
        %v1535 = vsel %vm825, %v1532, 0
        %v1537 = vsel %vm825, %v1534, 0
        %1539 = vmatpush.xpose.msra.mxu0 0.0
        %1540 = vmatpush.xpose.msra.mxu0 0.0
        %1541 = vmatpush.xpose.msra.mxu0 0.0
        %1542 = vmatpush.xpose.msra.mxu0 0.0
        %1543 = vmatpush.xpose.msra.mxu0 0.0
        %1544 = vmatpush.xpose.msra.mxu0 0.0
        %1545 = vmatpush.xpose.msra.mxu0 0.0
        %1546 = vmatpush.xpose.msra.mxu0 0.0
        %1547 = vmatpush.xpose.msra.mxu0 0.0
        %1548 = vmatpush.xpose.msra.mxu0 0.0
        %1549 = vmatpush.xpose.msra.mxu0 0.0
        %1550 = vmatpush.xpose.msra.mxu0 0.0
        %1551 = vmatpush.xpose.msra.mxu0 0.0
        %1552 = vmatpush.xpose.msra.mxu0 0.0
        %1553 = vmatpush.xpose.msra.mxu0 0.0
        %1554 = vmatpush.xpose.msra.mxu0 %v1537
        %1555 = vmatmul.f32.gmra.mxu0 %v1535
        %v1556 = vpop.f32.mrf.mxu0
        %v1557 = vadd.f32 0.0, %v1556
        %1558 = vdwg.mxu0
        %1559 = vrot.lane.b32.xlu0 %v817, 104
        %v1560 = vpop.permute.xlu0 %1559
        %1561 = vrot.lane.b32.xlu0 %v817, 72
        %v1562 = vpop.permute.xlu0 %1561
        %v1563 = vsel %vm825, %v1560, 0
        %v1565 = vsel %vm825, %v1562, 0
        %1567 = vmatpush.xpose.msra.mxu0 0.0
        %1568 = vmatpush.xpose.msra.mxu0 0.0
        %1569 = vmatpush.xpose.msra.mxu0 0.0
        %1570 = vmatpush.xpose.msra.mxu0 0.0
        %1571 = vmatpush.xpose.msra.mxu0 0.0
        %1572 = vmatpush.xpose.msra.mxu0 0.0
        %1573 = vmatpush.xpose.msra.mxu0 0.0
        %1574 = vmatpush.xpose.msra.mxu0 0.0
        %1575 = vmatpush.xpose.msra.mxu0 0.0
        %1576 = vmatpush.xpose.msra.mxu0 0.0
        %1577 = vmatpush.xpose.msra.mxu0 0.0
        %1578 = vmatpush.xpose.msra.mxu0 0.0
        %1579 = vmatpush.xpose.msra.mxu0 0.0
        %1580 = vmatpush.xpose.msra.mxu0 0.0
        %1581 = vmatpush.xpose.msra.mxu0 0.0
        %1582 = vmatpush.xpose.msra.mxu0 %v1565
        %1583 = vmatmul.f32.gmra.mxu0 %v1563
        %v1584 = vpop.f32.mrf.mxu0
        %v1585 = vadd.f32 0.0, %v1584
        %1586 = vdwg.mxu0
        %1587 = vrot.lane.b32.xlu0 %v820, 104
        %v1588 = vpop.permute.xlu0 %1587
        %1589 = vrot.lane.b32.xlu0 %v820, 72
        %v1590 = vpop.permute.xlu0 %1589
        %v1591 = vsel %vm825, %v1588, 0
        %v1593 = vsel %vm825, %v1590, 0
        %1595 = vmatpush.xpose.msra.mxu0 0.0
        %1596 = vmatpush.xpose.msra.mxu0 0.0
        %1597 = vmatpush.xpose.msra.mxu0 0.0
        %1598 = vmatpush.xpose.msra.mxu0 0.0
        %1599 = vmatpush.xpose.msra.mxu0 0.0
        %1600 = vmatpush.xpose.msra.mxu0 0.0
        %1601 = vmatpush.xpose.msra.mxu0 0.0
        %1602 = vmatpush.xpose.msra.mxu0 0.0
        %1603 = vmatpush.xpose.msra.mxu0 0.0
        %1604 = vmatpush.xpose.msra.mxu0 0.0
        %1605 = vmatpush.xpose.msra.mxu0 0.0
        %1606 = vmatpush.xpose.msra.mxu0 0.0
        %1607 = vmatpush.xpose.msra.mxu0 0.0
        %1608 = vmatpush.xpose.msra.mxu0 0.0
        %1609 = vmatpush.xpose.msra.mxu0 0.0
        %1610 = vmatpush.xpose.msra.mxu0 %v1593
        %1611 = vmatmul.f32.gmra.mxu0 %v1591
        %v1612 = vpop.f32.mrf.mxu0
        %v1613 = vadd.f32 0.0, %v1612
        %1614 = vdwg.mxu0
        %v1615 = vmul.f32 %v1557, 0.35355338
        %v1616 = vmul.f32 %v1585, 0.35355338
        %v1617 = vmul.f32 %v1613, 0.35355338
        %v1618 = vsel %vm825, %v1615, -inf
        %1619 = vmax.xlane.f32.xlu0 %v1618
        %v1620 = vpop.xlane.xlu0 %1619
        %v1621 = vsel %vm825, %v1616, -inf
        %1622 = vmax.xlane.f32.xlu0 %v1621
        %v1623 = vpop.xlane.xlu0 %1622
        %v1624 = vsel %vm825, %v1617, -inf
        %1625 = vmax.xlane.f32.xlu0 %v1624
        %v1626 = vpop.xlane.xlu0 %1625
        %v1627 = vsub.f32 %v1615, %v1620
        %v1628 = vsub.f32 %v1616, %v1623
        %v1629 = vsub.f32 %v1617, %v1626
        %v1630 = vmul.f32 %v1627, 1.442695
        %v1631 = vpow.pop %v1630
        %v1632 = vmul.f32 %v1628, 1.442695
        %v1633 = vpow.pop %v1632
        %v1634 = vmul.f32 %v1629, 1.442695
        %v1635 = vpow.pop %v1634
        %v1636 = vsel %vm825, %v1631, 0.0
        %1637 = vadd.xlane.f32.xlu0 %v1636
        %v1638 = vpop.xlane.xlu0 %1637
        %v1639 = vsel %vm825, %v1633, 0.0
        %1640 = vadd.xlane.f32.xlu0 %v1639
        %v1641 = vpop.xlane.xlu0 %1640
        %v1642 = vsel %vm825, %v1635, 0.0
        %1643 = vadd.xlane.f32.xlu0 %v1642
        %v1644 = vpop.xlane.xlu0 %1643
        %v1645 = vrcp.pop %v1638
        %v1646 = vmul.f32 %v1638, %v1645
        %v1647 = vsub.f32 1.0, %v1646
        %v1648 = vmul.f32 %v1645, %v1647
        %v1649 = vadd.f32 %v1645, %v1648
        %vm1650 = vweird.f32 %v1638
        %vm1651 = vweird.f32 %v1645
        %vm1652 = vmor %vm1650, %vm1651
        %v1653 = vsel %vm1652, %v1645, %v1649
        %v1654 = vand.u32 2147483647, %v1638
        %vm1655 = vcmp.eq.f32.partialorder %v1654, 8.507059e+37
        %v1656 = vand.u32 %v1638, 2147483648
        %v1657 = vor.u32 1.1754944e-38, %v1656
        %v1658 = vsel %vm1655, %v1657, %v1653
        %v1659 = vrcp.pop %v1641
        %v1660 = vmul.f32 %v1641, %v1659
        %v1661 = vsub.f32 1.0, %v1660
        %v1662 = vmul.f32 %v1659, %v1661
        %v1663 = vadd.f32 %v1659, %v1662
        %vm1664 = vweird.f32 %v1641
        %vm1665 = vweird.f32 %v1659
        %vm1666 = vmor %vm1664, %vm1665
        %v1667 = vsel %vm1666, %v1659, %v1663
        %v1668 = vand.u32 2147483647, %v1641
        %vm1669 = vcmp.eq.f32.partialorder %v1668, 8.507059e+37
        %v1670 = vand.u32 %v1641, 2147483648
        %v1671 = vor.u32 1.1754944e-38, %v1670
        %v1672 = vsel %vm1669, %v1671, %v1667
        %v1673 = vrcp.pop %v1644
        %v1674 = vmul.f32 %v1644, %v1673
        %v1675 = vsub.f32 1.0, %v1674
        %v1676 = vmul.f32 %v1673, %v1675
        %v1677 = vadd.f32 %v1673, %v1676
        %vm1678 = vweird.f32 %v1644
        %vm1679 = vweird.f32 %v1673
        %vm1680 = vmor %vm1678, %vm1679
        %v1681 = vsel %vm1680, %v1673, %v1677
        %v1682 = vand.u32 2147483647, %v1644
        %vm1683 = vcmp.eq.f32.partialorder %v1682, 8.507059e+37
        %v1684 = vand.u32 %v1644, 2147483648
        %v1685 = vor.u32 1.1754944e-38, %v1684
        %v1686 = vsel %vm1683, %v1685, %v1681
        %v1687 = vmul.f32 %v1631, %v1658
        %v1688 = vmul.f32 %v1633, %v1672
        %v1689 = vmul.f32 %v1635, %v1686
        %1690 = vrot.lane.b32.xlu0 %v814, 40
        %v1691 = vpop.permute.xlu0 %1690
        %v1694 = vsel %vm825, %v1687, 0
        %1696 = vmatpush.msra.mxu0 0.0
        %1697 = vmatpush.msra.mxu0 0.0
        %1698 = vmatpush.msra.mxu0 0.0
        %1699 = vmatpush.msra.mxu0 0.0
        %1700 = vmatpush.msra.mxu0 0.0
        %1701 = vmatpush.msra.mxu0 0.0
        %1702 = vmatpush.msra.mxu0 0.0
        %1703 = vmatpush.msra.mxu0 0.0
        %1704 = vmatpush.msra.mxu0 0.0
        %1705 = vmatpush.msra.mxu0 0.0
        %1706 = vmatpush.msra.mxu0 0.0
        %1707 = vmatpush.msra.mxu0 0.0
        %1708 = vmatpush.msra.mxu0 0.0
        %1709 = vmatpush.msra.mxu0 0.0
        %1710 = vmatpush.msra.mxu0 0.0
        %1711 = vmatpush.msra.mxu0 %v1691
        %1712 = vmatmul.f32.gmra.mxu0 %v1694
        %v1713 = vpop.f32.mrf.mxu0
        %v1714 = vadd.f32 0.0, %v1713
        %1715 = vdwg.mxu0
        %1716 = vrot.lane.b32.xlu0 %v817, 40
        %v1717 = vpop.permute.xlu0 %1716
        %v1720 = vsel %vm825, %v1688, 0
        %1722 = vmatpush.msra.mxu0 0.0
        %1723 = vmatpush.msra.mxu0 0.0
        %1724 = vmatpush.msra.mxu0 0.0
        %1725 = vmatpush.msra.mxu0 0.0
        %1726 = vmatpush.msra.mxu0 0.0
        %1727 = vmatpush.msra.mxu0 0.0
        %1728 = vmatpush.msra.mxu0 0.0
        %1729 = vmatpush.msra.mxu0 0.0
        %1730 = vmatpush.msra.mxu0 0.0
        %1731 = vmatpush.msra.mxu0 0.0
        %1732 = vmatpush.msra.mxu0 0.0
        %1733 = vmatpush.msra.mxu0 0.0
        %1734 = vmatpush.msra.mxu0 0.0
        %1735 = vmatpush.msra.mxu0 0.0
        %1736 = vmatpush.msra.mxu0 0.0
        %1737 = vmatpush.msra.mxu0 %v1717
        %1738 = vmatmul.f32.gmra.mxu0 %v1720
        %v1739 = vpop.f32.mrf.mxu0
        %v1740 = vadd.f32 0.0, %v1739
        %1741 = vdwg.mxu0
        %1742 = vrot.lane.b32.xlu0 %v820, 40
        %v1743 = vpop.permute.xlu0 %1742
        %v1746 = vsel %vm825, %v1689, 0
        %1748 = vmatpush.msra.mxu0 0.0
        %1749 = vmatpush.msra.mxu0 0.0
        %1750 = vmatpush.msra.mxu0 0.0
        %1751 = vmatpush.msra.mxu0 0.0
        %1752 = vmatpush.msra.mxu0 0.0
        %1753 = vmatpush.msra.mxu0 0.0
        %1754 = vmatpush.msra.mxu0 0.0
        %1755 = vmatpush.msra.mxu0 0.0
        %1756 = vmatpush.msra.mxu0 0.0
        %1757 = vmatpush.msra.mxu0 0.0
        %1758 = vmatpush.msra.mxu0 0.0
        %1759 = vmatpush.msra.mxu0 0.0
        %1760 = vmatpush.msra.mxu0 0.0
        %1761 = vmatpush.msra.mxu0 0.0
        %1762 = vmatpush.msra.mxu0 0.0
        %1763 = vmatpush.msra.mxu0 %v1743
        %1764 = vmatmul.f32.gmra.mxu0 %v1746
        %v1765 = vpop.f32.mrf.mxu0
        %v1766 = vadd.f32 0.0, %v1765
        %1767 = vdwg.mxu0
        %1771 = vrot.lane.b32.xlu0 %v1240, 8
        %v1772 = vpop.permute.xlu0 %1771
        %1773 = vrot.lane.b32.xlu0 %v1266, 8
        %v1774 = vpop.permute.xlu0 %1773
        %1775 = vrot.lane.b32.xlu0 %v1292, 8
        %v1776 = vpop.permute.xlu0 %1775
        %1783 = vrot.lane.b32.xlu0 %v1477, 16
        %v1784 = vpop.permute.xlu0 %1783
        %1785 = vrot.lane.b32.xlu0 %v1503, 16
        %v1786 = vpop.permute.xlu0 %1785
        %1787 = vrot.lane.b32.xlu0 %v1529, 16
        %v1788 = vpop.permute.xlu0 %1787
        %1795 = vrot.lane.b32.xlu0 %v1714, 24
        %v1796 = vpop.permute.xlu0 %1795
        %1797 = vrot.lane.b32.xlu0 %v1740, 24
        %v1798 = vpop.permute.xlu0 %1797
        %1799 = vrot.lane.b32.xlu0 %v1766, 24
        %v1800 = vpop.permute.xlu0 %1799
        %v1804 = vsel %vm825, %v1003, %v1772
        %v1805 = vsel %vm825, %v1029, %v1774
        %v1806 = vsel %vm825, %v1055, %v1776
        %vm1807 = vcmask 130048
        %v1808 = vsel %vm1807, %v1804, %v1784
        %v1809 = vsel %vm1807, %v1805, %v1786
        %v1810 = vsel %vm1807, %v1806, %v1788
        %vm1811 = vcmask 195584
        %v1812 = vsel %vm1811, %v1808, %v1796
        %v1813 = vsel %vm1811, %v1809, %v1798
        %v1814 = vsel %vm1811, %v1810, %v1800
        %v1815 = vld [vmem:[%s740] sm:$0xff]
        %v1816 = vld [vmem:[%s740 + $0x8] sm:$0xff]
        %v1817 = vld [vmem:[%s740 + $0x10] sm:$0xff]
        %v1818 = vld [vmem:[%s740 + $0x18] sm:$0xff]
        %v1819 = vld [vmem:[%s743] sm:$0x1]
        %v1821 = vperm.slane %v1819, 0
        %v1824 = vsel %vm786, %v1812, 0
        %v1827 = vsel %vm786, %v1813, 0
        %v1830 = vsel %vm786, %v1814, 0
        %1832 = vmatpush.msra.mxu0 0.0
        %1833 = vmatpush.msra.mxu0 0.0
        %1834 = vmatpush.msra.mxu0 0.0
        %1835 = vmatpush.msra.mxu0 0.0
        %1836 = vmatpush.msra.mxu0 0.0
        %1837 = vmatpush.msra.mxu0 0.0
        %1838 = vmatpush.msra.mxu0 0.0
        %1839 = vmatpush.msra.mxu0 0.0
        %1840 = vmatpush.msra.mxu0 0.0
        %1841 = vmatpush.msra.mxu0 0.0
        %1842 = vmatpush.msra.mxu0 0.0
        %1843 = vmatpush.msra.mxu0 0.0
        %1844 = vmatpush.msra.mxu0 %v1818
        %1845 = vmatpush.msra.mxu0 %v1817
        %1846 = vmatpush.msra.mxu0 %v1816
        %1847 = vmatpush.msra.mxu0 %v1815
        %1848 = vmatmul.f32.gmra.mxu0 %v1824
        %v1849 = vpop.f32.mrf.mxu0
        %v1850 = vadd.f32 %v1821, %v1849
        %1851 = vmatmul.f32.gmra.mxu0 %v1827
        %v1852 = vpop.f32.mrf.mxu0
        %v1853 = vadd.f32 %v1821, %v1852
        %1854 = vmatmul.f32.gmra.mxu0 %v1830
        %v1855 = vpop.f32.mrf.mxu0
        %v1856 = vadd.f32 %v1821, %v1855
        %1857 = vdwg.mxu0
        %v1858 = vadd.f32 %v775, %v1850
        %v1859 = vadd.f32 %v776, %v1853
        %v1860 = vadd.f32 %v777, %v1856
        %v1861 = vld [vmem:[%s612] sm:$0x1]
        %v1862 = vld [vmem:[%s621] sm:$0x1]
        %v1863 = vsel %vm786, %v1858, 0.0
        %1864 = vadd.xlane.f32.xlu0 %v1863
        %v1865 = vpop.xlane.xlu0 %1864
        %v1866 = vsel %vm786, %v1859, 0.0
        %1867 = vadd.xlane.f32.xlu0 %v1866
        %v1868 = vpop.xlane.xlu0 %1867
        %v1869 = vsel %vm786, %v1860, 0.0
        %1870 = vadd.xlane.f32.xlu0 %v1869
        %v1871 = vpop.xlane.xlu0 %1870
        %v1872 = vrcp.pop 32.0
        %v1873 = vmul.f32 32.0, %v1872
        %v1874 = vsub.f32 1.0, %v1873
        %v1875 = vmul.f32 %v1872, %v1874
        %v1876 = vadd.f32 %v1872, %v1875
        %vm1877 = vweird.f32 %v1872
        %v1878 = vsel %vm1877, %v1872, %v1876
        %v1879 = vmul.f32 %v1865, %v1878
        %v1880 = vmul.f32 %v1868, %v1878
        %v1881 = vmul.f32 %v1871, %v1878
        %v1882 = vsub.f32 %v1858, %v1879
        %v1883 = vsub.f32 %v1859, %v1880
        %v1884 = vsub.f32 %v1860, %v1881
        %v1885 = vmul.f32 %v1882, %v1882
        %v1886 = vmul.f32 %v1883, %v1883
        %v1887 = vmul.f32 %v1884, %v1884
        %v1888 = vsel %vm786, %v1885, 0.0
        %1889 = vadd.xlane.f32.xlu0 %v1888
        %v1890 = vpop.xlane.xlu0 %1889
        %v1891 = vsel %vm786, %v1886, 0.0
        %1892 = vadd.xlane.f32.xlu0 %v1891
        %v1893 = vpop.xlane.xlu0 %1892
        %v1894 = vsel %vm786, %v1887, 0.0
        %1895 = vadd.xlane.f32.xlu0 %v1894
        %v1896 = vpop.xlane.xlu0 %1895
        %v1897 = vmul.f32 %v1890, %v1878
        %v1898 = vmul.f32 %v1893, %v1878
        %v1899 = vmul.f32 %v1896, %v1878
        %v1900 = vadd.f32 %v1897, 1e-05
        %v1901 = vadd.f32 %v1898, 1e-05
        %v1902 = vadd.f32 %v1899, 1e-05
        %v1903 = vrsqrt.pop %v1900
        %v1904 = vmul.f32 %v1903, %v1900
        %v1905 = vmul.f32 %v1904, %v1903
        %v1906 = vmul.f32 0.5, %v1905
        %v1907 = vsub.f32 1.5, %v1906
        %v1908 = vmul.f32 %v1903, %v1907
        %vm1909 = vweird.f32 %v1900
        %vm1910 = vweird.f32 %v1903
        %vm1911 = vmor %vm1909, %vm1910
        %v1912 = vsel %vm1911, %v1903, %v1908
        %v1913 = vrsqrt.pop %v1901
        %v1914 = vmul.f32 %v1913, %v1901
        %v1915 = vmul.f32 %v1914, %v1913
        %v1916 = vmul.f32 0.5, %v1915
        %v1917 = vsub.f32 1.5, %v1916
        %v1918 = vmul.f32 %v1913, %v1917
        %vm1919 = vweird.f32 %v1901
        %vm1920 = vweird.f32 %v1913
        %vm1921 = vmor %vm1919, %vm1920
        %v1922 = vsel %vm1921, %v1913, %v1918
        %v1923 = vrsqrt.pop %v1902
        %v1924 = vmul.f32 %v1923, %v1902
        %v1925 = vmul.f32 %v1924, %v1923
        %v1926 = vmul.f32 0.5, %v1925
        %v1927 = vsub.f32 1.5, %v1926
        %v1928 = vmul.f32 %v1923, %v1927
        %vm1929 = vweird.f32 %v1902
        %vm1930 = vweird.f32 %v1923
        %vm1931 = vmor %vm1929, %vm1930
        %v1932 = vsel %vm1931, %v1923, %v1928
        %v1933 = vmul.f32 %v1882, %v1912
        %v1934 = vmul.f32 %v1883, %v1922
        %v1935 = vmul.f32 %v1884, %v1932
        %v1937 = vperm.slane %v1861, 0
        %v1939 = vmul.f32 %v1933, %v1937
        %v1940 = vmul.f32 %v1934, %v1937
        %v1941 = vmul.f32 %v1935, %v1937
        %v1943 = vperm.slane %v1862, 0
        %v1945 = vadd.f32 %v1939, %v1943
        %v1946 = vadd.f32 %v1940, %v1943
        %v1947 = vadd.f32 %v1941, %v1943
        %v1948 = vld [vmem:[%s748] sm:$0xff]
        %v1949 = vld [vmem:[%s748 + $0x8] sm:$0xff]
        %v1950 = vld [vmem:[%s748 + $0x10] sm:$0xff]
        %v1951 = vld [vmem:[%s748 + $0x18] sm:$0xff]
        %v1952 = vld [vmem:[%s751] sm:$0x1]
        %v1954 = vperm.slane %v1952, 0
        %v1957 = vsel %vm786, %v1945, 0
        %v1960 = vsel %vm786, %v1946, 0
        %v1963 = vsel %vm786, %v1947, 0
        %1965 = vmatpush.msra.mxu0 0.0
        %1966 = vmatpush.msra.mxu0 0.0
        %1967 = vmatpush.msra.mxu0 0.0
        %1968 = vmatpush.msra.mxu0 0.0
        %1969 = vmatpush.msra.mxu0 0.0
        %1970 = vmatpush.msra.mxu0 0.0
        %1971 = vmatpush.msra.mxu0 0.0
        %1972 = vmatpush.msra.mxu0 0.0
        %1973 = vmatpush.msra.mxu0 0.0
        %1974 = vmatpush.msra.mxu0 0.0
        %1975 = vmatpush.msra.mxu0 0.0
        %1976 = vmatpush.msra.mxu0 0.0
        %1977 = vmatpush.msra.mxu0 %v1951
        %1978 = vmatpush.msra.mxu0 %v1950
        %1979 = vmatpush.msra.mxu0 %v1949
        %1980 = vmatpush.msra.mxu0 %v1948
        %1981 = vmatmul.f32.gmra.mxu0 %v1957
        %v1982 = vpop.f32.mrf.mxu0
        %v1983 = vadd.f32 %v1954, %v1982
        %1984 = vmatmul.f32.gmra.mxu0 %v1960
        %v1985 = vpop.f32.mrf.mxu0
        %v1986 = vadd.f32 %v1954, %v1985
        %1987 = vmatmul.f32.gmra.mxu0 %v1963
        %v1988 = vpop.f32.mrf.mxu0
        %v1989 = vadd.f32 %v1954, %v1988
        %1990 = vdwg.mxu0
        %v1991 = vmax.f32 %v1983, 0.0
        %v1992 = vmax.f32 %v1986, 0.0
        %v1993 = vmax.f32 %v1989, 0.0
        %v1994 = vld [vmem:[%s756] sm:$0xff]
        %v1995 = vld [vmem:[%s756 + $0x8] sm:$0xff]
        %v1996 = vld [vmem:[%s756 + $0x10] sm:$0xff]
        %v1997 = vld [vmem:[%s756 + $0x18] sm:$0xff]
        %v1998 = vld [vmem:[%s756 + $0x20] sm:$0xff]
        %v1999 = vld [vmem:[%s756 + $0x28] sm:$0xff]
        %v2000 = vld [vmem:[%s756 + $0x30] sm:$0xff]
        %v2001 = vld [vmem:[%s756 + $0x38] sm:$0xff]
        %v2002 = vld [vmem:[%s630] sm:$0x1]
        %v2004 = vperm.slane %v2002, 0
        %vm2006 = vcmask 523264
        %v2008 = vsel %vm2006, %v1991, 0
        %v2011 = vsel %vm2006, %v1992, 0
        %v2014 = vsel %vm2006, %v1993, 0
        %2016 = vmatpush.msra.mxu0 0.0
        %2017 = vmatpush.msra.mxu0 0.0
        %2018 = vmatpush.msra.mxu0 0.0
        %2019 = vmatpush.msra.mxu0 0.0
        %2020 = vmatpush.msra.mxu0 0.0
        %2021 = vmatpush.msra.mxu0 0.0
        %2022 = vmatpush.msra.mxu0 0.0
        %2023 = vmatpush.msra.mxu0 0.0
        %2024 = vmatpush.msra.mxu0 %v2001
        %2025 = vmatpush.msra.mxu0 %v2000
        %2026 = vmatpush.msra.mxu0 %v1999
        %2027 = vmatpush.msra.mxu0 %v1998
        %2028 = vmatpush.msra.mxu0 %v1997
        %2029 = vmatpush.msra.mxu0 %v1996
        %2030 = vmatpush.msra.mxu0 %v1995
        %2031 = vmatpush.msra.mxu0 %v1994
        %2032 = vmatmul.f32.gmra.mxu0 %v2008
        %v2033 = vpop.f32.mrf.mxu0
        %v2034 = vadd.f32 %v2004, %v2033
        %2035 = vmatmul.f32.gmra.mxu0 %v2011
        %v2036 = vpop.f32.mrf.mxu0
        %v2037 = vadd.f32 %v2004, %v2036
        %2038 = vmatmul.f32.gmra.mxu0 %v2014
        %v2039 = vpop.f32.mrf.mxu0
        %v2040 = vadd.f32 %v2004, %v2039
        %2041 = vdwg.mxu0
        %v2042 = vadd.f32 %v1945, %v2034
        %v2043 = vadd.f32 %v1946, %v2037
        %v2044 = vadd.f32 %v1947, %v2040
        %v2045 = vld [vmem:[%s639] sm:$0x1]
        %v2046 = vld [vmem:[%s759] sm:$0x1]
        %v2047 = vsel %vm786, %v2042, 0.0
        %2048 = vadd.xlane.f32.xlu0 %v2047
        %v2049 = vpop.xlane.xlu0 %2048
        %v2050 = vsel %vm786, %v2043, 0.0
        %2051 = vadd.xlane.f32.xlu0 %v2050
        %v2052 = vpop.xlane.xlu0 %2051
        %v2053 = vsel %vm786, %v2044, 0.0
        %2054 = vadd.xlane.f32.xlu0 %v2053
        %v2055 = vpop.xlane.xlu0 %2054
        %v2056 = vmul.f32 %v2049, %v1878
        %v2057 = vmul.f32 %v2052, %v1878
        %v2058 = vmul.f32 %v2055, %v1878
        %v2059 = vsub.f32 %v2042, %v2056
        %v2060 = vsub.f32 %v2043, %v2057
        %v2061 = vsub.f32 %v2044, %v2058
        %v2062 = vmul.f32 %v2059, %v2059
        %v2063 = vmul.f32 %v2060, %v2060
        %v2064 = vmul.f32 %v2061, %v2061
        %v2065 = vsel %vm786, %v2062, 0.0
        %2066 = vadd.xlane.f32.xlu0 %v2065
        %v2067 = vpop.xlane.xlu0 %2066
        %v2068 = vsel %vm786, %v2063, 0.0
        %2069 = vadd.xlane.f32.xlu0 %v2068
        %v2070 = vpop.xlane.xlu0 %2069
        %v2071 = vsel %vm786, %v2064, 0.0
        %2072 = vadd.xlane.f32.xlu0 %v2071
        %v2073 = vpop.xlane.xlu0 %2072
        %v2074 = vmul.f32 %v2067, %v1878
        %v2075 = vmul.f32 %v2070, %v1878
        %v2076 = vmul.f32 %v2073, %v1878
        %v2077 = vadd.f32 %v2074, 1e-05
        %v2078 = vadd.f32 %v2075, 1e-05
        %v2079 = vadd.f32 %v2076, 1e-05
        %v2080 = vrsqrt.pop %v2077
        %v2081 = vmul.f32 %v2080, %v2077
        %v2082 = vmul.f32 %v2081, %v2080
        %v2083 = vmul.f32 0.5, %v2082
        %v2084 = vsub.f32 1.5, %v2083
        %v2085 = vmul.f32 %v2080, %v2084
        %vm2086 = vweird.f32 %v2077
        %vm2087 = vweird.f32 %v2080
        %vm2088 = vmor %vm2086, %vm2087
        %v2089 = vsel %vm2088, %v2080, %v2085
        %v2090 = vrsqrt.pop %v2078
        %v2091 = vmul.f32 %v2090, %v2078
        %v2092 = vmul.f32 %v2091, %v2090
        %v2093 = vmul.f32 0.5, %v2092
        %v2094 = vsub.f32 1.5, %v2093
        %v2095 = vmul.f32 %v2090, %v2094
        %vm2096 = vweird.f32 %v2078
        %vm2097 = vweird.f32 %v2090
        %vm2098 = vmor %vm2096, %vm2097
        %v2099 = vsel %vm2098, %v2090, %v2095
        %v2100 = vrsqrt.pop %v2079
        %v2101 = vmul.f32 %v2100, %v2079
        %v2102 = vmul.f32 %v2101, %v2100
        %v2103 = vmul.f32 0.5, %v2102
        %v2104 = vsub.f32 1.5, %v2103
        %v2105 = vmul.f32 %v2100, %v2104
        %vm2106 = vweird.f32 %v2079
        %vm2107 = vweird.f32 %v2100
        %vm2108 = vmor %vm2106, %vm2107
        %v2109 = vsel %vm2108, %v2100, %v2105
        %v2110 = vmul.f32 %v2059, %v2089
        %v2111 = vmul.f32 %v2060, %v2099
        %v2112 = vmul.f32 %v2061, %v2109
        %v2114 = vperm.slane %v2045, 0
        %v2116 = vmul.f32 %v2110, %v2114
        %v2117 = vmul.f32 %v2111, %v2114
        %v2118 = vmul.f32 %v2112, %v2114
        %v2120 = vperm.slane %v2046, 0
        %v2122 = vadd.f32 %v2116, %v2120
        %v2123 = vadd.f32 %v2117, %v2120
        %v2124 = vadd.f32 %v2118, %v2120
        %2125 = vst.msk [vmem:[#allocation2] sm:$0xff] %vm786, %v2122
        %2126 = vst.msk [vmem:[#allocation2 + $0x8] sm:$0xff] %vm786, %v2123
        %2127 = vst.msk [vmem:[#allocation2 + $0x10] sm:$0xff] %vm786, %v2124
        %p2128 = scmp.eq.s32.totalorder %s41, 2
        // Predicated region
        $region101: #{tpu_custom_call.1} parent=71 // pred_check
          %p2129 = pneg %p2128
        $region102: #{tpu_custom_call.1} parent=71 // pred_check_branch
          %2131 = sbr.rel (%p2129) target = $region104
        $region103: #{tpu_custom_call.1} parent=71 // pred_region
          %v2133 = vrot.slane %v2123, 7
          %v2136 = vrot.slane %v2124, 6
          %vm2138 = vcmask 1040384
          %v2139 = vsel %vm2138, %v2122, %v2133
          %vm2140 = vcmask 1041408
          %v2141 = vsel %vm2140, %v2139, %v2136
          %v2142 = vmax.f32 %v2141, 0.0
          %vm2143 = vcmask 256000
          %2144 = vst.msk [vmem:[%s763] sm:$0x7] %vm2143, %v2142
        $region104: #{tpu_custom_call.1} parent=71 // pred_fallthru
          _
        %p2145 = scmp.lt.s32.totalorder %s40, 1
        %s2146 = scalar_select %p2145, %s40, 1
        %s2147 = smul.addr %s2146, 4
        %s2148 = scalar_lea.vmem %s13, %s2147
        // Predicated region
        $region105: #{tpu_custom_call.1} parent=71 // pred_check
          %p2149 = pneg %p404
        $region106: #{tpu_custom_call.1} parent=71 // pred_check_branch
          %2151 = sbr.rel (%p2149) target = $region108
        $region107: #{tpu_custom_call.1} parent=71 // pred_region
          _
        $region108: #{tpu_custom_call.1} parent=71 // pred_fallthru
          _
      $region72: #{tpu_custom_call.1} parent=5 // pred_fallthru
        _
      %p2152 = scmp.le.s32.totalorder 2, %s31
      // Predicated region
      $region109: #{tpu_custom_call.1} parent=5 // pred_check
        %p2153 = pneg %p2152
      $region110: #{tpu_custom_call.1} parent=5 // pred_check_branch
        %2155 = sbr.rel (%p2153) target = $region112
      $region111: #{tpu_custom_call.1} parent=5 // pred_region
        %s2156 = ssub.s32 %s31, 2
        // Predicated region
        $region113: #{tpu_custom_call.1} parent=111 // pred_check
          %p2157 = pneg %p410
        $region114: #{tpu_custom_call.1} parent=111 // pred_check_branch
          %2159 = sbr.rel (%p2157) target = $region116
        $region115: #{tpu_custom_call.1} parent=111 // pred_region
          %p2160 = scmp.lt.s32.totalorder %s42, 1
          %s2161 = scalar_select %p2160, %s42, 1
          %s2162 = smul.addr %s2161, 4
          %s2163 = scalar_lea.vmem %s13, %s2162
        $region116: #{tpu_custom_call.1} parent=111 // pred_fallthru
          _
      $region112: #{tpu_custom_call.1} parent=5 // pred_fallthru
        _
    $region6: #{tpu_custom_call.1} parent=1 // loop_footer
      %s35 = sadd.s32 1, %s31
    $region7: #{tpu_custom_call.1} parent=1 // loop_footer_branch
      %30 = sbr.rel target = $region3
    $region8: #{tpu_custom_call.1} parent=1 // loop_exit
      _
    %2164 = vsyncpa [#allocation4], 1
    %s2165 = scalar_lea.sflag [#allocation4], 1
    %2166 = vsyncpa %s2165, 1
    %2167 = vsyncpa [#allocation6], 1
    %s2168 = scalar_lea.sflag [#allocation6], 1
    %2169 = vsyncpa %s2168, 1
    %2170 = vsyncpa [#allocation9], 1
    %s2171 = scalar_lea.sflag [#allocation9], 1
    %2172 = vsyncpa %s2171, 1
    %2173 = vsyncpa [#allocation12], 1
    %s2174 = scalar_lea.sflag [#allocation12], 1
    %2175 = vsyncpa %s2174, 1

</llo_original>
